<compile_context>
chip_gen: v5e
topology: v5e:2x2
jax: 0.10.0
libtpu: 0.0.40
codegen_flags: <defaults>
</compile_context>

<pallas_src>
import functools
import math

import jax
import jax.numpy as jnp
from jax import lax
from jax.experimental import pallas as pl
from jax.experimental.pallas import tpu as pltpu

PATCH = 9      # self.patch_size
STRIDE_V = 3   # self.stride_v
LANE = 128
SUBLANE = 8


def _round_up(x, m):
    return (x + m - 1) // m * m


def _divisor_tile(n, cap):
    """Largest multiple of SUBLANE that divides n (a multiple of SUBLANE) and is <= cap."""
    t = min(n, max(SUBLANE, cap // SUBLANE * SUBLANE))
    while n % t:
        t -= SUBLANE
    return t


# --------------------------------------------------------------------------
# Kernel A (used twice): patch projection = conv-as-matmul + bias + ReLU.
# Emits the projected features in bf16 (operands of the bf16 cdist dot) and
# 0.5*||y||^2 in f32 (halved-norm trick: the cdist factor 2 is folded into the
# scalar scale, removing one VPU multiply per element of the attention tile).
# --------------------------------------------------------------------------
def _project_kernel(xp_ref, w_ref, b_ref, proj_ref, hsq_ref):
    y = jnp.dot(xp_ref[...], w_ref[...], preferred_element_type=jnp.float32)
    y = jnp.maximum(y + b_ref[...], 0.0)                          # [T, Dh_pad] f32
    hsq_ref[...] = 0.5 * jnp.sum(y * y, axis=-1, keepdims=True)   # [T, 1] f32
    proj_ref[...] = y.astype(jnp.bfloat16)


def _project(patches, w, b, tile, cparams):
    n_pad, kf_pad = patches.shape
    dh_pad = w.shape[1]
    return pl.pallas_call(
        _project_kernel,
        out_shape=(jax.ShapeDtypeStruct((n_pad, dh_pad), jnp.bfloat16),
                   jax.ShapeDtypeStruct((n_pad, 1), jnp.float32)),
        grid=(n_pad // tile,),
        in_specs=[
            pl.BlockSpec((tile, kf_pad), lambda i: (i, 0)),       # patch rows
            pl.BlockSpec((kf_pad, dh_pad), lambda i: (0, 0)),     # weight
            pl.BlockSpec((1, dh_pad), lambda i: (0, 0)),          # bias
        ],
        out_specs=(pl.BlockSpec((tile, dh_pad), lambda i: (i, 0)),
                   pl.BlockSpec((tile, 1), lambda i: (i, 0))),
        compiler_params=cparams,
    )(patches, w, b)


# --------------------------------------------------------------------------
# Kernel B: flash attention.  grid = (Nq tiles [parallel], Nk tiles [arbitrary]).
# Online softmax with running max; the exp-sum is accumulated by the MXU via
# the ones column of the augmented v patches (index dv).
# --------------------------------------------------------------------------
def _flash_attn_kernel(dv, exp_dtype, q_ref, qhsq_ref, k_ref, khsq_ref,
                       v_ref, nscale_ref, o_ref, m_sc, acc_sc):
    j = pl.program_id(1)

    @pl.when(j == 0)
    def _():
        m_sc[...] = jnp.full(m_sc.shape, -jnp.inf, m_sc.dtype)
        acc_sc[...] = jnp.zeros(acc_sc.shape, acc_sc.dtype)

    # halved squared distance  h = ||q||^2/2 + ||k||^2/2 - q.k   (>= 0)
    qk = lax.dot_general(q_ref[...], k_ref[...], (((1,), (1,)), ((), ())),
                         preferred_element_type=jnp.float32)      # [TQ, TK]
    h = jnp.maximum(qhsq_ref[...] + khsq_ref[...] - qk, 0.0)
    # dot_prod * scale_att == -scale_att * sqrt(2*h); sqrt(2) folded into nscale
    logits = jnp.sqrt(h) * nscale_ref[0]

    m_prev = m_sc[...]
    m_new = jnp.maximum(m_prev, jnp.max(logits, axis=-1, keepdims=True))
    alpha = jnp.exp(m_prev - m_new)                               # [TQ, 1] f32
    p = jnp.exp((logits - m_new).astype(exp_dtype)).astype(jnp.bfloat16)
    acc_sc[...] = alpha * acc_sc[...] + jnp.dot(
        p, v_ref[...], preferred_element_type=jnp.float32)
    m_sc[...] = m_new

    @pl.when(j == pl.num_programs(1) - 1)
    def _():
        inv = pl.reciprocal(acc_sc[:, dv:dv + 1], approx=True)    # 1 / sum(exp)
        o_ref[...] = acc_sc[...] * inv


# --------------------------------------------------------------------------
# Wrapper glue (plain JAX): patch extraction, padding, output re-fold.
# --------------------------------------------------------------------------
def _patch_rows_strided(x, ksize, stride):
    """x: [C,H,W] -> ([n_h*n_w, C*k*k], n_h, n_w); features in (c,kh,kw) order,
    rows in (h,w) row-major order — identical to torch unfold / im2col."""
    C, H, W = x.shape
    n_h = (H - ksize) // stride + 1
    n_w = (W - ksize) // stride + 1
    p = lax.conv_general_dilated_patches(
        x[None], filter_shape=(ksize, ksize), window_strides=(stride, stride),
        padding="VALID", dimension_numbers=("NCHW", "OIHW", "NCHW"))
    rows = p.reshape(C * ksize * ksize, n_h * n_w).T
    return rows, n_h, n_w


def _patch_rows_nonoverlap(x, ksize):
    """Stride == kernel (q path): pure reshape/transpose, no gather."""
    C, H, W = x.shape
    n_h, n_w = H // ksize, W // ksize
    x = x[:, :n_h * ksize, :n_w * ksize]
    x = x.reshape(C, n_h, ksize, n_w, ksize).transpose(1, 3, 0, 2, 4)
    return x.reshape(n_h * n_w, C * ksize * ksize), n_h, n_w


def _pad2d(a, rows, cols):
    return jnp.pad(a, ((0, rows - a.shape[0]), (0, cols - a.shape[1])))


@jax.jit
def bottleneck_attention(q, k, v, params):
    """Mirrors BottleneckAttention_modified.forward (batch must be 1, as the
    PyTorch code's final `.view(1, ...)` requires)."""
    assert q.ndim == 4, f"Expected 4D tensor, got {q.ndim}D tensor"
    assert q.shape[0] == 1 and v.shape[1] == 3

    wq, bq = params["wq"], params["bq"]   # [Dh, C, 9, 9], [Dh]
    wk, bk = params["wk"], params["bk"]
    scale_att = params["scale_att"]
    dim_head = int(wq.shape[0])

    # im2col for the two convs and the v-unfold (single HLO each)
    qp, nqh, nqw = _patch_rows_nonoverlap(q[0], PATCH)      # [Nq, C*81]
    kp, _, _ = _patch_rows_strided(k[0], PATCH, STRIDE_V)   # [Nk, C*81]
    vp, _, _ = _patch_rows_strided(v[0], PATCH, STRIDE_V)   # [Nk, 3*81]
    Nq, Kf = qp.shape
    Nk, Dv = vp.shape
    assert kp.shape[0] == Nk, "k / v patch counts must match"

    # ---- generation-aware knobs (trace-time only) --------------------------
    kind = jax.devices()[0].device_kind.lower()
    vmem_limit = (96 if ("v5" in kind or "v6" in kind) else 48) * 1024 * 1024
    exp_dtype = jnp.bfloat16 if ("v6" in kind or "v7" in kind) else jnp.float32

    # ---- lane-dense padded sizes -------------------------------------------
    Kf_pad = _round_up(Kf, LANE)                  # 324 -> 384
    Dh_pad = _round_up(dim_head, LANE)            # 8   -> 128
    Dv_aug = _round_up(Dv + 1, LANE)              # 243+1 (ones col) -> 256

    nq8 = _round_up(Nq, SUBLANE)
    if nq8 <= SUBLANE:
        TQ = nq8
    elif nq8 <= 512:
        TQ = _round_up((nq8 + 1) // 2, SUBLANE)   # >=2 q tiles: both v7x TCs busy
    else:
        TQ = 256
    Nq_pad = _round_up(nq8, TQ)

    Nk_pad = _round_up(Nk, LANE)
    if Nk_pad % 512 == 0:
        TK = 512
    elif Nk_pad % 256 == 0:
        TK = 256
    else:
        TK = LANE

    # ---- padded / augmented operands (bf16 on MXU paths, f32 elsewhere) ----
    qp_p = _pad2d(qp, Nq_pad, Kf_pad).astype(jnp.bfloat16)
    kp_p = _pad2d(kp, Nk_pad, Kf_pad).astype(jnp.bfloat16)
    vp_aug = jnp.concatenate([vp, jnp.ones((Nk, 1), vp.dtype)], axis=1)
    vp_p = _pad2d(vp_aug, Nk_pad, Dv_aug).astype(jnp.bfloat16)
    wq_m = _pad2d(wq.reshape(dim_head, Kf).T.astype(jnp.float32),
                  Kf_pad, Dh_pad).astype(jnp.bfloat16)
    wk_m = _pad2d(wk.reshape(dim_head, Kf).T.astype(jnp.float32),
                  Kf_pad, Dh_pad).astype(jnp.bfloat16)
    bq_m = _pad2d(bq.reshape(1, dim_head).astype(jnp.float32), 1, Dh_pad)
    bk_m = _pad2d(bk.reshape(1, dim_head).astype(jnp.float32), 1, Dh_pad)
    # pre-negated scale with the cdist factor sqrt(2) folded in (SMEM scalar)
    nscale = (-math.sqrt(2.0) * jnp.asarray(scale_att, jnp.float32)).reshape(1)

    proj_params = pltpu.CompilerParams(
        dimension_semantics=("parallel",), vmem_limit_bytes=vmem_limit)
    attn_params = pltpu.CompilerParams(
        dimension_semantics=("parallel", "arbitrary"),
        vmem_limit_bytes=vmem_limit)

    # ---- kernel A (x2): project q and k patches once -----------------------
    tile_cap = (4 * 1024 * 1024) // (Kf_pad * 2)   # keep streamed patch tile ~4 MiB
    q_b, qhsq = _project(qp_p, wq_m, bq_m, _divisor_tile(Nq_pad, tile_cap),
                         proj_params)
    k_b, khsq = _project(kp_p, wk_m, bk_m, _divisor_tile(Nk_pad, tile_cap),
                         proj_params)

    # padded key rows -> huge ||k||^2/2 so their logits are ~-1e15 and their
    # softmax weight is exactly 0 (assumes scale_att > 0, as initialized).
    khsq_row = jnp.where(jnp.arange(Nk_pad)[None, :] < Nk,
                         khsq.reshape(1, Nk_pad), jnp.float32(1e30))

    # ---- kernel B: flash attention over (Nq tiles x Nk tiles) --------------
    cost = pl.CostEstimate(
        flops=int(2 * Nq_pad * Nk_pad * (Dh_pad + Dv_aug)),
        transcendentals=int(2 * Nq_pad * Nk_pad),
        bytes_accessed=int(Nq_pad * Dh_pad * 2 + Nk_pad * Dh_pad * 2
                           + Nk_pad * Dv_aug * 2 + Nq_pad * Dv_aug * 4))

    out = pl.pallas_call(
        functools.partial(_flash_attn_kernel, Dv, exp_dtype),
        out_shape=jax.ShapeDtypeStruct((Nq_pad, Dv_aug), jnp.float32),
        grid=(Nq_pad // TQ, Nk_pad // TK),
        in_specs=[
            pl.BlockSpec((TQ, Dh_pad), lambda i, j: (i, 0)),     # q        (bf16)
            pl.BlockSpec((TQ, 1), lambda i, j: (i, 0)),          # ||q||^2/2 (f32)
            pl.BlockSpec((TK, Dh_pad), lambda i, j: (j, 0)),     # k        (bf16)
            pl.BlockSpec((1, TK), lambda i, j: (0, j)),          # ||k||^2/2 + mask
            pl.BlockSpec((TK, Dv_aug), lambda i, j: (j, 0)),     # v + ones col
            pl.BlockSpec(memory_space=pltpu.MemorySpace.SMEM),   # -sqrt(2)*scale
        ],
        out_specs=pl.BlockSpec((TQ, Dv_aug), lambda i, j: (i, 0)),
        scratch_shapes=[pltpu.VMEM((TQ, 1), jnp.float32),        # running max
                        pltpu.VMEM((TQ, Dv_aug), jnp.float32)],  # acc (+denom col)
        compiler_params=attn_params,
        cost_estimate=cost,
    )(q_b, qhsq, k_b, khsq_row, vp_p, nscale)

    # fold patches back: [Nq, 3*9*9] -> [1, 3, nqh*9, nqw*9]
    # (matches view(unfold_shape).permute(0,1,4,2,5,3,6).view(1, C, H, W))
    out = out[:Nq, :Dv]
    out_img = out.reshape(nqh, nqw, 3, PATCH, PATCH).transpose(2, 0, 3, 1, 4)
    out_img = out_img.reshape(1, 3, nqh * PATCH, nqw * PATCH)
    loss_unEmbedd = 0
    return out_img, loss_unEmbedd


if __name__ == "__main__":
    key = jax.random.PRNGKey(0)
    dim, dim_head = 4, 8
    H = W = 18          # q/k/v spatial size (>= 9, divisible by 9 for the q conv)

    k1, k2, k3, k4, k5, k6, k7 = jax.random.split(key, 7)
    q_in = jax.random.normal(k1, (1, dim, H, W), jnp.float32)
    k_in = jax.random.normal(k2, (1, dim, H, W), jnp.float32)
    v_in = jax.random.normal(k3, (1, 3, H, W), jnp.float32)

    params = {
        "wq": 0.05 * jax.random.normal(k4, (dim_head, dim, PATCH, PATCH), jnp.float32),
        "bq": 0.05 * jax.random.normal(k5, (dim_head,), jnp.float32),
        "wk": 0.05 * jax.random.normal(k6, (dim_head, dim, PATCH, PATCH), jnp.float32),
        "bk": 0.05 * jax.random.normal(k7, (dim_head,), jnp.float32),
        "scale_att": jnp.float32(1.0),
    }

    out_img, loss = bottleneck_attention(q_in, k_in, v_in, params)
    jax.block_until_ready(out_img)
    assert out_img.shape == (1, 3, (H // PATCH) * PATCH, (W // PATCH) * PATCH)
    assert bool(jnp.all(jnp.isfinite(out_img)))
    print("KERNEL_OK")
</pallas_src>

<mosaic_0001>
module attributes {stable_mosaic.version = 11 : i64} {
  func.func @_project_kernel(%arg0: i32, %arg1: memref<128x384xbf16, #tpu.memory_space<vmem>>, %arg2: memref<384x128xbf16, #tpu.memory_space<vmem>>, %arg3: memref<1x128xf32, #tpu.memory_space<vmem>>, %arg4: memref<128x128xbf16, #tpu.memory_space<vmem>>, %arg5: memref<128x1xf32, #tpu.memory_space<vmem>>) attributes {dimension_semantics = [#tpu.dimension_semantics<parallel>], iteration_bounds = array<i64: 1>, scalar_prefetch = 0 : i64, scratch_operands = 0 : i64, tpu.core_type = #tpu.core_type<tc>, window_params = [{transform_indices = @transform_0, window_bounds = array<i64: 128, 384>}, {pipeline_mode = #tpu.pipeline_mode<synchronous>, transform_indices = @transform_1, window_bounds = array<i64: 384, 128>}, {pipeline_mode = #tpu.pipeline_mode<synchronous>, transform_indices = @transform_2, window_bounds = array<i64: 1, 128>}, {transform_indices = @transform_3, window_bounds = array<i64: 128, 128>}, {transform_indices = @transform_4, window_bounds = array<i64: 128, 1>}]} {
    %c0 = arith.constant 0 : index
    %c0_0 = arith.constant 0 : index
    %0 = vector.load %arg1[%c0, %c0_0] : memref<128x384xbf16, #tpu.memory_space<vmem>>, vector<128x384xbf16>
    %c0_1 = arith.constant 0 : index
    %c0_2 = arith.constant 0 : index
    %1 = vector.load %arg2[%c0_1, %c0_2] : memref<384x128xbf16, #tpu.memory_space<vmem>>, vector<384x128xbf16>
    %cst = arith.constant dense<0.000000e+00> : vector<128x128xf32>
    %2 = tpu.matmul %0, %1, %cst {dimension_numbers = #tpu.dot_dimension_numbers<[1], [0], [0], [1], [0, 0, 1, 1], [], []>} : vector<128x384xbf16>, vector<384x128xbf16>, vector<128x128xf32> -> vector<128x128xf32>
    %c0_3 = arith.constant 0 : index
    %c0_4 = arith.constant 0 : index
    %3 = vector.load %arg3[%c0_3, %c0_4] : memref<1x128xf32, #tpu.memory_space<vmem>>, vector<1x128xf32>
    %4 = vector.broadcast %3 : vector<1x128xf32> to vector<128x128xf32>
    %5 = arith.addf %2, %4 : vector<128x128xf32>
    %cst_5 = arith.constant 0.000000e+00 : f32
    %6 = vector.broadcast %cst_5 : f32 to vector<128x128xf32>
    %7 = arith.maximumf %5, %6 : vector<128x128xf32>
    %8 = arith.mulf %7, %7 : vector<128x128xf32>
    %cst_6 = arith.constant dense<0.000000e+00> : vector<128xf32>
    %9 = vector.multi_reduction <add>, %8, %cst_6 [1] : vector<128x128xf32> to vector<128xf32>
    %10 = vector.shape_cast %9 : vector<128xf32> to vector<128x1xf32>
    %cst_7 = arith.constant 5.000000e-01 : f32
    %11 = vector.broadcast %cst_7 : f32 to vector<128x1xf32>
    %12 = arith.mulf %11, %10 : vector<128x1xf32>
    %c0_8 = arith.constant 0 : index
    %c0_9 = arith.constant 0 : index
    %13 = vector.load %arg5[%c0_8, %c0_9] : memref<128x1xf32, #tpu.memory_space<vmem>>, vector<128x1xf32>
    tpu.vector_store %arg5[%c0_8, %c0_9], %12 {strides = array<i32>} : memref<128x1xf32, #tpu.memory_space<vmem>>, vector<128x1xf32>,
    %14 = arith.truncf %7 : vector<128x128xf32> to vector<128x128xbf16>
    %c0_10 = arith.constant 0 : index
    %c0_11 = arith.constant 0 : index
    %15 = vector.load %arg4[%c0_10, %c0_11] : memref<128x128xbf16, #tpu.memory_space<vmem>>, vector<128x128xbf16>
    tpu.vector_store %arg4[%c0_10, %c0_11], %14 {strides = array<i32>} : memref<128x128xbf16, #tpu.memory_space<vmem>>, vector<128x128xbf16>,
    return
  }
  func.func @transform_0(%arg0: i32) -> (i32, i32) {
    %c0_i32 = arith.constant 0 : i32
    %c0_i32_0 = arith.constant 0 : i32
    return %arg0, %c0_i32 : i32, i32
  }
  func.func @transform_1(%arg0: i32) -> (i32, i32) {
    %c0_i32 = arith.constant 0 : i32
    %c0_i32_0 = arith.constant 0 : i32
    %c0_i32_1 = arith.constant 0 : i32
    return %c0_i32, %c0_i32_0 : i32, i32
  }
  func.func @transform_2(%arg0: i32) -> (i32, i32) {
    %c0_i32 = arith.constant 0 : i32
    %c0_i32_0 = arith.constant 0 : i32
    %c0_i32_1 = arith.constant 0 : i32
    return %c0_i32, %c0_i32_0 : i32, i32
  }
  func.func @transform_3(%arg0: i32) -> (i32, i32) {
    %c0_i32 = arith.constant 0 : i32
    %c0_i32_0 = arith.constant 0 : i32
    return %arg0, %c0_i32 : i32, i32
  }
  func.func @transform_4(%arg0: i32) -> (i32, i32) {
    %c0_i32 = arith.constant 0 : i32
    %c0_i32_0 = arith.constant 0 : i32
    return %arg0, %c0_i32 : i32, i32
  }
}

module attributes {stable_mosaic.version = 11 : i64} {
  func.func @_project_kernel(%arg0: i32, %arg1: memref<8x384xbf16, #tpu.memory_space<vmem>>, %arg2: memref<384x128xbf16, #tpu.memory_space<vmem>>, %arg3: memref<1x128xf32, #tpu.memory_space<vmem>>, %arg4: memref<8x128xbf16, #tpu.memory_space<vmem>>, %arg5: memref<8x1xf32, #tpu.memory_space<vmem>>) attributes {dimension_semantics = [#tpu.dimension_semantics<parallel>], iteration_bounds = array<i64: 1>, scalar_prefetch = 0 : i64, scratch_operands = 0 : i64, tpu.core_type = #tpu.core_type<tc>, window_params = [{transform_indices = @transform_0, window_bounds = array<i64: 8, 384>}, {pipeline_mode = #tpu.pipeline_mode<synchronous>, transform_indices = @transform_1, window_bounds = array<i64: 384, 128>}, {pipeline_mode = #tpu.pipeline_mode<synchronous>, transform_indices = @transform_2, window_bounds = array<i64: 1, 128>}, {transform_indices = @transform_3, window_bounds = array<i64: 8, 128>}, {transform_indices = @transform_4, window_bounds = array<i64: 8, 1>}]} {
    %c0 = arith.constant 0 : index
    %c0_0 = arith.constant 0 : index
    %0 = vector.load %arg1[%c0, %c0_0] : memref<8x384xbf16, #tpu.memory_space<vmem>>, vector<8x384xbf16>
    %c0_1 = arith.constant 0 : index
    %c0_2 = arith.constant 0 : index
    %1 = vector.load %arg2[%c0_1, %c0_2] : memref<384x128xbf16, #tpu.memory_space<vmem>>, vector<384x128xbf16>
    %cst = arith.constant dense<0.000000e+00> : vector<8x128xf32>
    %2 = tpu.matmul %0, %1, %cst {dimension_numbers = #tpu.dot_dimension_numbers<[1], [0], [0], [1], [0, 0, 1, 1], [], []>} : vector<8x384xbf16>, vector<384x128xbf16>, vector<8x128xf32> -> vector<8x128xf32>
    %c0_3 = arith.constant 0 : index
    %c0_4 = arith.constant 0 : index
    %3 = vector.load %arg3[%c0_3, %c0_4] : memref<1x128xf32, #tpu.memory_space<vmem>>, vector<1x128xf32>
    %4 = vector.broadcast %3 : vector<1x128xf32> to vector<8x128xf32>
    %5 = arith.addf %2, %4 : vector<8x128xf32>
    %cst_5 = arith.constant 0.000000e+00 : f32
    %6 = vector.broadcast %cst_5 : f32 to vector<8x128xf32>
    %7 = arith.maximumf %5, %6 : vector<8x128xf32>
    %8 = arith.mulf %7, %7 : vector<8x128xf32>
    %cst_6 = arith.constant dense<0.000000e+00> : vector<8xf32>
    %9 = vector.multi_reduction <add>, %8, %cst_6 [1] : vector<8x128xf32> to vector<8xf32>
    %10 = vector.shape_cast %9 : vector<8xf32> to vector<8x1xf32>
    %cst_7 = arith.constant 5.000000e-01 : f32
    %11 = vector.broadcast %cst_7 : f32 to vector<8x1xf32>
    %12 = arith.mulf %11, %10 : vector<8x1xf32>
    %c0_8 = arith.constant 0 : index
    %c0_9 = arith.constant 0 : index
    %13 = vector.load %arg5[%c0_8, %c0_9] : memref<8x1xf32, #tpu.memory_space<vmem>>, vector<8x1xf32>
    tpu.vector_store %arg5[%c0_8, %c0_9], %12 {strides = array<i32>} : memref<8x1xf32, #tpu.memory_space<vmem>>, vector<8x1xf32>,
    %14 = arith.truncf %7 : vector<8x128xf32> to vector<8x128xbf16>
    %c0_10 = arith.constant 0 : index
    %c0_11 = arith.constant 0 : index
    %15 = vector.load %arg4[%c0_10, %c0_11] : memref<8x128xbf16, #tpu.memory_space<vmem>>, vector<8x128xbf16>
    tpu.vector_store %arg4[%c0_10, %c0_11], %14 {strides = array<i32>} : memref<8x128xbf16, #tpu.memory_space<vmem>>, vector<8x128xbf16>,
    return
  }
  func.func @transform_0(%arg0: i32) -> (i32, i32) {
    %c0_i32 = arith.constant 0 : i32
    %c0_i32_0 = arith.constant 0 : i32
    return %arg0, %c0_i32 : i32, i32
  }
  func.func @transform_1(%arg0: i32) -> (i32, i32) {
    %c0_i32 = arith.constant 0 : i32
    %c0_i32_0 = arith.constant 0 : i32
    %c0_i32_1 = arith.constant 0 : i32
    return %c0_i32, %c0_i32_0 : i32, i32
  }
  func.func @transform_2(%arg0: i32) -> (i32, i32) {
    %c0_i32 = arith.constant 0 : i32
    %c0_i32_0 = arith.constant 0 : i32
    %c0_i32_1 = arith.constant 0 : i32
    return %c0_i32, %c0_i32_0 : i32, i32
  }
  func.func @transform_3(%arg0: i32) -> (i32, i32) {
    %c0_i32 = arith.constant 0 : i32
    %c0_i32_0 = arith.constant 0 : i32
    return %arg0, %c0_i32 : i32, i32
  }
  func.func @transform_4(%arg0: i32) -> (i32, i32) {
    %c0_i32 = arith.constant 0 : i32
    %c0_i32_0 = arith.constant 0 : i32
    return %arg0, %c0_i32 : i32, i32
  }
}

module attributes {stable_mosaic.version = 11 : i64} {
  func.func @_flash_attn_kernel(%arg0: i32, %arg1: i32, %arg2: memref<8x128xbf16, #tpu.memory_space<vmem>>, %arg3: memref<8x1xf32, #tpu.memory_space<vmem>>, %arg4: memref<128x128xbf16, #tpu.memory_space<vmem>>, %arg5: memref<1x128xf32, #tpu.memory_space<vmem>>, %arg6: memref<128x256xbf16, #tpu.memory_space<vmem>>, %arg7: memref<1xf32, #tpu.memory_space<smem>>, %arg8: memref<8x256xf32, #tpu.memory_space<vmem>>, %arg9: memref<8x1xf32, #tpu.memory_space<vmem>>, %arg10: memref<8x256xf32, #tpu.memory_space<vmem>>) attributes {dimension_semantics = [#tpu.dimension_semantics<parallel>, #tpu.dimension_semantics<arbitrary>], iteration_bounds = array<i64: 1, 1>, scalar_prefetch = 0 : i64, scratch_operands = 2 : i64, tpu.core_type = #tpu.core_type<tc>, window_params = [{transform_indices = @transform_0, window_bounds = array<i64: 8, 128>}, {transform_indices = @transform_1, window_bounds = array<i64: 8, 1>}, {transform_indices = @transform_2, window_bounds = array<i64: 128, 128>}, {transform_indices = @transform_3, window_bounds = array<i64: 1, 128>}, {transform_indices = @transform_4, window_bounds = array<i64: 128, 256>}, {transform_indices = @transform_5, window_bounds = array<i64: 1>}, {transform_indices = @transform_6, window_bounds = array<i64: 8, 256>}]} {
    %c0_i32 = arith.constant 0 : i32
    %0 = arith.cmpi eq, %arg1, %c0_i32 : i32
    %1 = arith.extui %0 : i1 to i32
    %c0_i32_0 = arith.constant 0 : i32
    %2 = arith.cmpi ne, %1, %c0_i32_0 : i32
    scf.if %2 {
      %cst_24 = arith.constant 0xFF800000 : f32
      %39 = vector.broadcast %cst_24 : f32 to vector<8x1xf32>
      %c0_25 = arith.constant 0 : index
      %c0_26 = arith.constant 0 : index
      %40 = vector.load %arg9[%c0_25, %c0_26] : memref<8x1xf32, #tpu.memory_space<vmem>>, vector<8x1xf32>
      tpu.vector_store %arg9[%c0_25, %c0_26], %39 {strides = array<i32>} : memref<8x1xf32, #tpu.memory_space<vmem>>, vector<8x1xf32>,
      %cst_27 = arith.constant 0.000000e+00 : f32
      %41 = vector.broadcast %cst_27 : f32 to vector<8x256xf32>
      %c0_28 = arith.constant 0 : index
      %c0_29 = arith.constant 0 : index
      %42 = vector.load %arg10[%c0_28, %c0_29] : memref<8x256xf32, #tpu.memory_space<vmem>>, vector<8x256xf32>
      tpu.vector_store %arg10[%c0_28, %c0_29], %41 {strides = array<i32>} : memref<8x256xf32, #tpu.memory_space<vmem>>, vector<8x256xf32>,
    } else {
    }
    %c0 = arith.constant 0 : index
    %c0_1 = arith.constant 0 : index
    %3 = vector.load %arg2[%c0, %c0_1] : memref<8x128xbf16, #tpu.memory_space<vmem>>, vector<8x128xbf16>
    %c0_2 = arith.constant 0 : index
    %c0_3 = arith.constant 0 : index
    %4 = vector.load %arg4[%c0_2, %c0_3] : memref<128x128xbf16, #tpu.memory_space<vmem>>, vector<128x128xbf16>
    %cst = arith.constant dense<0.000000e+00> : vector<8x128xf32>
    %5 = tpu.matmul %3, %4, %cst {dimension_numbers = #tpu.dot_dimension_numbers<[1], [1], [0], [0], [0, 0, 1, 0], [], []>} : vector<8x128xbf16>, vector<128x128xbf16>, vector<8x128xf32> -> vector<8x128xf32>
    %c0_4 = arith.constant 0 : index
    %c0_5 = arith.constant 0 : index
    %6 = vector.load %arg3[%c0_4, %c0_5] : memref<8x1xf32, #tpu.memory_space<vmem>>, vector<8x1xf32>
    %c0_6 = arith.constant 0 : index
    %c0_7 = arith.constant 0 : index
    %7 = vector.load %arg5[%c0_6, %c0_7] : memref<1x128xf32, #tpu.memory_space<vmem>>, vector<1x128xf32>
    %8 = vector.broadcast %6 : vector<8x1xf32> to vector<8x128xf32>
    %9 = vector.broadcast %7 : vector<1x128xf32> to vector<8x128xf32>
    %10 = arith.addf %8, %9 : vector<8x128xf32>
    %11 = arith.subf %10, %5 : vector<8x128xf32>
    %cst_8 = arith.constant 0.000000e+00 : f32
    %12 = vector.broadcast %cst_8 : f32 to vector<8x128xf32>
    %13 = arith.maximumf %11, %12 : vector<8x128xf32>
    %14 = math.sqrt %13 : vector<8x128xf32>
    %c0_9 = arith.constant 0 : index
    %15 = memref.load %arg7[%c0_9] : memref<1xf32, #tpu.memory_space<smem>>
    %16 = vector.broadcast %15 : f32 to vector<8x128xf32>
    %17 = arith.mulf %14, %16 : vector<8x128xf32>
    %c0_10 = arith.constant 0 : index
    %c0_11 = arith.constant 0 : index
    %18 = vector.load %arg9[%c0_10, %c0_11] : memref<8x1xf32, #tpu.memory_space<vmem>>, vector<8x1xf32>
    %cst_12 = arith.constant dense<0xFF800000> : vector<8xf32>
    %19 = vector.multi_reduction <maximumf>, %17, %cst_12 [1] : vector<8x128xf32> to vector<8xf32>
    %20 = vector.shape_cast %19 : vector<8xf32> to vector<8x1xf32>
    %21 = arith.maximumf %18, %20 : vector<8x1xf32>
    %22 = arith.subf %18, %21 : vector<8x1xf32>
    %23 = math.exp %22 : vector<8x1xf32>
    %24 = vector.broadcast %21 : vector<8x1xf32> to vector<8x128xf32>
    %25 = arith.subf %17, %24 : vector<8x128xf32>
    %26 = math.exp %25 : vector<8x128xf32>
    %27 = arith.truncf %26 : vector<8x128xf32> to vector<8x128xbf16>
    %c0_13 = arith.constant 0 : index
    %c0_14 = arith.constant 0 : index
    %28 = vector.load %arg10[%c0_13, %c0_14] : memref<8x256xf32, #tpu.memory_space<vmem>>, vector<8x256xf32>
    %29 = vector.broadcast %23 : vector<8x1xf32> to vector<8x256xf32>
    %30 = arith.mulf %29, %28 : vector<8x256xf32>
    %c0_15 = arith.constant 0 : index
    %c0_16 = arith.constant 0 : index
    %31 = vector.load %arg6[%c0_15, %c0_16] : memref<128x256xbf16, #tpu.memory_space<vmem>>, vector<128x256xbf16>
    %cst_17 = arith.constant dense<0.000000e+00> : vector<8x256xf32>
    %32 = tpu.matmul %27, %31, %cst_17 {dimension_numbers = #tpu.dot_dimension_numbers<[1], [0], [0], [1], [0, 0, 1, 1], [], []>} : vector<8x128xbf16>, vector<128x256xbf16>, vector<8x256xf32> -> vector<8x256xf32>
    %33 = arith.addf %30, %32 : vector<8x256xf32>
    %c0_18 = arith.constant 0 : index
    %c0_19 = arith.constant 0 : index
    %34 = vector.load %arg10[%c0_18, %c0_19] : memref<8x256xf32, #tpu.memory_space<vmem>>, vector<8x256xf32>
    tpu.vector_store %arg10[%c0_18, %c0_19], %33 {strides = array<i32>} : memref<8x256xf32, #tpu.memory_space<vmem>>, vector<8x256xf32>,
    %c0_20 = arith.constant 0 : index
    %c0_21 = arith.constant 0 : index
    %35 = vector.load %arg9[%c0_20, %c0_21] : memref<8x1xf32, #tpu.memory_space<vmem>>, vector<8x1xf32>
    tpu.vector_store %arg9[%c0_20, %c0_21], %21 {strides = array<i32>} : memref<8x1xf32, #tpu.memory_space<vmem>>, vector<8x1xf32>,
    %c0_i32_22 = arith.constant 0 : i32
    %36 = arith.cmpi eq, %arg1, %c0_i32_22 : i32
    %37 = arith.extui %36 : i1 to i32
    %c0_i32_23 = arith.constant 0 : i32
    %38 = arith.cmpi ne, %37, %c0_i32_23 : i32
    scf.if %38 {
      %c0_24 = arith.constant 0 : index
      %c243 = arith.constant 243 : index
      %39 = vector.load %arg10[%c0_24, %c243] : memref<8x256xf32, #tpu.memory_space<vmem>>, vector<8x1xf32>
      %40 = tpu.reciprocal %39 {approx = true} : vector<8x1xf32> -> vector<8x1xf32>
      %c0_25 = arith.constant 0 : index
      %c0_26 = arith.constant 0 : index
      %41 = vector.load %arg10[%c0_25, %c0_26] : memref<8x256xf32, #tpu.memory_space<vmem>>, vector<8x256xf32>
      %42 = vector.broadcast %40 : vector<8x1xf32> to vector<8x256xf32>
      %43 = arith.mulf %41, %42 : vector<8x256xf32>
      %c0_27 = arith.constant 0 : index
      %c0_28 = arith.constant 0 : index
      %44 = vector.load %arg8[%c0_27, %c0_28] : memref<8x256xf32, #tpu.memory_space<vmem>>, vector<8x256xf32>
      tpu.vector_store %arg8[%c0_27, %c0_28], %43 {strides = array<i32>} : memref<8x256xf32, #tpu.memory_space<vmem>>, vector<8x256xf32>,
    } else {
    }
    return
  }
  func.func @transform_0(%arg0: i32, %arg1: i32) -> (i32, i32) {
    %c0_i32 = arith.constant 0 : i32
    %c0_i32_0 = arith.constant 0 : i32
    return %arg0, %c0_i32 : i32, i32
  }
  func.func @transform_1(%arg0: i32, %arg1: i32) -> (i32, i32) {
    %c0_i32 = arith.constant 0 : i32
    %c0_i32_0 = arith.constant 0 : i32
    return %arg0, %c0_i32 : i32, i32
  }
  func.func @transform_2(%arg0: i32, %arg1: i32) -> (i32, i32) {
    %c0_i32 = arith.constant 0 : i32
    %c0_i32_0 = arith.constant 0 : i32
    return %arg1, %c0_i32 : i32, i32
  }
  func.func @transform_3(%arg0: i32, %arg1: i32) -> (i32, i32) {
    %c0_i32 = arith.constant 0 : i32
    %c0_i32_0 = arith.constant 0 : i32
    return %c0_i32, %arg1 : i32, i32
  }
  func.func @transform_4(%arg0: i32, %arg1: i32) -> (i32, i32) {
    %c0_i32 = arith.constant 0 : i32
    %c0_i32_0 = arith.constant 0 : i32
    return %arg1, %c0_i32 : i32, i32
  }
  func.func @transform_5(%arg0: i32, %arg1: i32) -> i32 {
    %c0_i32 = arith.constant 0 : i32
    %c0_i32_0 = arith.constant 0 : i32
    return %c0_i32 : i32
  }
  func.func @transform_6(%arg0: i32, %arg1: i32) -> (i32, i32) {
    %c0_i32 = arith.constant 0 : i32
    %c0_i32_0 = arith.constant 0 : i32
    return %arg0, %c0_i32 : i32, i32
  }
}

</mosaic_0001>

<llo_original>
// kernel: squeeze.0
$region0: #{squeeze.0}
  %s0 = inlined_call_operand.vmem [shape: bf16[1,4,18,18], index: 0, kind: input, shape index: {}]
  %s1 = inlined_call_operand.vmem [shape: bf16[4,2,9,2,9], index: 1, kind: output, shape index: {}]
  $region1: #{squeeze.0} parent=0
    #allocation0 [shape = 'u8[294912]{0}', space=vmem, size = 0x48000, scoped, tag = 'scoped mem for output reshape']
    #allocation1 [shape = 'u8[73728]{0}', space=vmem, size = 0x12000, scoped, tag = 'scoped mem for input reshape']
    %s3 = ssub.s32 16, 1
    %s4 = scalar_lea.vmem %s0, 34
    %s5 = sshrl.u32 %s3, 1
    %s6 = sor.u32 %s3, %s5
    %s7 = sand.u32 %s6, 85
    %s8 = sshrl.u32 %s7, 1
    %s9 = sor.u32 %s7, %s8
    %s10 = sand.u32 51, %s9
    %s11 = sshrl.u32 %s10, 2
    %s12 = sor.u32 %s10, %s11
    %s13 = sand.u32 15, %s12
    %v14 = vld [vmem:[%s4] sm:%s13]
    %v15 = vunpack.c.l.bf16 %v14
    %v16 = vunpack.c.h.bf16 %v14
    %s17 = scalar_lea.vmem [#allocation1], 136
    %18 = vst [vmem:[%s17] sm:%s3] %v15
    %s19 = scalar_lea.vmem %s0, 32
    %s20 = sshrl.u32 %s3, 1
    %s21 = sor.u32 %s3, %s20
    %s22 = sand.u32 %s21, 85
    %s23 = sshrl.u32 %s22, 1
    %s24 = sor.u32 %s22, %s23
    %s25 = sand.u32 51, %s24
    %s26 = sshrl.u32 %s25, 2
    %s27 = sor.u32 %s25, %s26
    %s28 = sand.u32 15, %s27
    %v29 = vld [vmem:[%s19] sm:%s28]
    %v30 = vunpack.c.l.bf16 %v29
    %v31 = vunpack.c.h.bf16 %v29
    %s32 = scalar_lea.vmem [#allocation1], 128
    %33 = vst [vmem:[%s32] sm:%s3] %v30
    %s34 = scalar_lea.vmem %s0, 30
    %s35 = sshrl.u32 %s3, 1
    %s36 = sor.u32 %s3, %s35
    %s37 = sand.u32 %s36, 85
    %s38 = sshrl.u32 %s37, 1
    %s39 = sor.u32 %s37, %s38
    %s40 = sand.u32 51, %s39
    %s41 = sshrl.u32 %s40, 2
    %s42 = sor.u32 %s40, %s41
    %s43 = sand.u32 15, %s42
    %v44 = vld [vmem:[%s34] sm:%s43]
    %v45 = vunpack.c.l.bf16 %v44
    %v46 = vunpack.c.h.bf16 %v44
    %s47 = scalar_lea.vmem [#allocation1], 120
    %48 = vst [vmem:[%s47] sm:%s3] %v45
    %s49 = scalar_lea.vmem %s0, 28
    %s50 = sshrl.u32 %s3, 1
    %s51 = sor.u32 %s3, %s50
    %s52 = sand.u32 %s51, 85
    %s53 = sshrl.u32 %s52, 1
    %s54 = sor.u32 %s52, %s53
    %s55 = sand.u32 51, %s54
    %s56 = sshrl.u32 %s55, 2
    %s57 = sor.u32 %s55, %s56
    %s58 = sand.u32 15, %s57
    %v59 = vld [vmem:[%s49] sm:%s58]
    %v60 = vunpack.c.l.bf16 %v59
    %v61 = vunpack.c.h.bf16 %v59
    %s62 = scalar_lea.vmem [#allocation1], 112
    %63 = vst [vmem:[%s62] sm:%s3] %v60
    %s64 = scalar_lea.vmem %s0, 26
    %s65 = sshrl.u32 %s3, 1
    %s66 = sor.u32 %s3, %s65
    %s67 = sand.u32 %s66, 85
    %s68 = sshrl.u32 %s67, 1
    %s69 = sor.u32 %s67, %s68
    %s70 = sand.u32 51, %s69
    %s71 = sshrl.u32 %s70, 2
    %s72 = sor.u32 %s70, %s71
    %s73 = sand.u32 15, %s72
    %v74 = vld [vmem:[%s64] sm:%s73]
    %v75 = vunpack.c.l.bf16 %v74
    %v76 = vunpack.c.h.bf16 %v74
    %s77 = scalar_lea.vmem [#allocation1], 104
    %78 = vst [vmem:[%s77] sm:%s3] %v75
    %s79 = scalar_lea.vmem %s0, 24
    %s80 = sshrl.u32 %s3, 1
    %s81 = sor.u32 %s3, %s80
    %s82 = sand.u32 %s81, 85
    %s83 = sshrl.u32 %s82, 1
    %s84 = sor.u32 %s82, %s83
    %s85 = sand.u32 51, %s84
    %s86 = sshrl.u32 %s85, 2
    %s87 = sor.u32 %s85, %s86
    %s88 = sand.u32 15, %s87
    %v89 = vld [vmem:[%s79] sm:%s88]
    %v90 = vunpack.c.l.bf16 %v89
    %v91 = vunpack.c.h.bf16 %v89
    %s92 = scalar_lea.vmem [#allocation1], 96
    %93 = vst [vmem:[%s92] sm:%s3] %v90
    %s94 = scalar_lea.vmem %s0, 22
    %s95 = sshrl.u32 %s3, 1
    %s96 = sor.u32 %s3, %s95
    %s97 = sand.u32 %s96, 85
    %s98 = sshrl.u32 %s97, 1
    %s99 = sor.u32 %s97, %s98
    %s100 = sand.u32 51, %s99
    %s101 = sshrl.u32 %s100, 2
    %s102 = sor.u32 %s100, %s101
    %s103 = sand.u32 15, %s102
    %v104 = vld [vmem:[%s94] sm:%s103]
    %v105 = vunpack.c.l.bf16 %v104
    %v106 = vunpack.c.h.bf16 %v104
    %s107 = scalar_lea.vmem [#allocation1], 88
    %108 = vst [vmem:[%s107] sm:%s3] %v105
    %s109 = scalar_lea.vmem %s0, 20
    %s110 = sshrl.u32 %s3, 1
    %s111 = sor.u32 %s3, %s110
    %s112 = sand.u32 %s111, 85
    %s113 = sshrl.u32 %s112, 1
    %s114 = sor.u32 %s112, %s113
    %s115 = sand.u32 51, %s114
    %s116 = sshrl.u32 %s115, 2
    %s117 = sor.u32 %s115, %s116
    %s118 = sand.u32 15, %s117
    %v119 = vld [vmem:[%s109] sm:%s118]
    %v120 = vunpack.c.l.bf16 %v119
    %v121 = vunpack.c.h.bf16 %v119
    %s122 = scalar_lea.vmem [#allocation1], 80
    %123 = vst [vmem:[%s122] sm:%s3] %v120
    %s124 = scalar_lea.vmem %s0, 18
    %s125 = sshrl.u32 %s3, 1
    %s126 = sor.u32 %s3, %s125
    %s127 = sand.u32 %s126, 85
    %s128 = sshrl.u32 %s127, 1
    %s129 = sor.u32 %s127, %s128
    %s130 = sand.u32 51, %s129
    %s131 = sshrl.u32 %s130, 2
    %s132 = sor.u32 %s130, %s131
    %s133 = sand.u32 15, %s132
    %v134 = vld [vmem:[%s124] sm:%s133]
    %v135 = vunpack.c.l.bf16 %v134
    %v136 = vunpack.c.h.bf16 %v134
    %s137 = scalar_lea.vmem [#allocation1], 72
    %138 = vst [vmem:[%s137] sm:%s3] %v135
    %s139 = scalar_lea.vmem %s0, 16
    %s140 = sshrl.u32 %s3, 1
    %s141 = sor.u32 %s3, %s140
    %s142 = sand.u32 %s141, 85
    %s143 = sshrl.u32 %s142, 1
    %s144 = sor.u32 %s142, %s143
    %s145 = sand.u32 51, %s144
    %s146 = sshrl.u32 %s145, 2
    %s147 = sor.u32 %s145, %s146
    %s148 = sand.u32 15, %s147
    %v149 = vld [vmem:[%s139] sm:%s148]
    %v150 = vunpack.c.l.bf16 %v149
    %v151 = vunpack.c.h.bf16 %v149
    %s152 = scalar_lea.vmem [#allocation1], 64
    %153 = vst [vmem:[%s152] sm:%s3] %v150
    %s154 = scalar_lea.vmem %s0, 14
    %s155 = sshrl.u32 %s3, 1
    %s156 = sor.u32 %s3, %s155
    %s157 = sand.u32 %s156, 85
    %s158 = sshrl.u32 %s157, 1
    %s159 = sor.u32 %s157, %s158
    %s160 = sand.u32 51, %s159
    %s161 = sshrl.u32 %s160, 2
    %s162 = sor.u32 %s160, %s161
    %s163 = sand.u32 15, %s162
    %v164 = vld [vmem:[%s154] sm:%s163]
    %v165 = vunpack.c.l.bf16 %v164
    %v166 = vunpack.c.h.bf16 %v164
    %s167 = scalar_lea.vmem [#allocation1], 56
    %168 = vst [vmem:[%s167] sm:%s3] %v165
    %s169 = scalar_lea.vmem %s0, 12
    %s170 = sshrl.u32 %s3, 1
    %s171 = sor.u32 %s3, %s170
    %s172 = sand.u32 %s171, 85
    %s173 = sshrl.u32 %s172, 1
    %s174 = sor.u32 %s172, %s173
    %s175 = sand.u32 51, %s174
    %s176 = sshrl.u32 %s175, 2
    %s177 = sor.u32 %s175, %s176
    %s178 = sand.u32 15, %s177
    %v179 = vld [vmem:[%s169] sm:%s178]
    %v180 = vunpack.c.l.bf16 %v179
    %v181 = vunpack.c.h.bf16 %v179
    %s182 = scalar_lea.vmem [#allocation1], 48
    %183 = vst [vmem:[%s182] sm:%s3] %v180
    %s184 = scalar_lea.vmem %s0, 10
    %s185 = sshrl.u32 %s3, 1
    %s186 = sor.u32 %s3, %s185
    %s187 = sand.u32 %s186, 85
    %s188 = sshrl.u32 %s187, 1
    %s189 = sor.u32 %s187, %s188
    %s190 = sand.u32 51, %s189
    %s191 = sshrl.u32 %s190, 2
    %s192 = sor.u32 %s190, %s191
    %s193 = sand.u32 15, %s192
    %v194 = vld [vmem:[%s184] sm:%s193]
    %v195 = vunpack.c.l.bf16 %v194
    %v196 = vunpack.c.h.bf16 %v194
    %s197 = scalar_lea.vmem [#allocation1], 40
    %198 = vst [vmem:[%s197] sm:%s3] %v195
    %s199 = scalar_lea.vmem %s0, 8
    %s200 = sshrl.u32 %s3, 1
    %s201 = sor.u32 %s3, %s200
    %s202 = sand.u32 %s201, 85
    %s203 = sshrl.u32 %s202, 1
    %s204 = sor.u32 %s202, %s203
    %s205 = sand.u32 51, %s204
    %s206 = sshrl.u32 %s205, 2
    %s207 = sor.u32 %s205, %s206
    %s208 = sand.u32 15, %s207
    %v209 = vld [vmem:[%s199] sm:%s208]
    %v210 = vunpack.c.l.bf16 %v209
    %v211 = vunpack.c.h.bf16 %v209
    %s212 = scalar_lea.vmem [#allocation1], 32
    %213 = vst [vmem:[%s212] sm:%s3] %v210
    %s214 = scalar_lea.vmem %s0, 6
    %s215 = sshrl.u32 %s3, 1
    %s216 = sor.u32 %s3, %s215
    %s217 = sand.u32 %s216, 85
    %s218 = sshrl.u32 %s217, 1
    %s219 = sor.u32 %s217, %s218
    %s220 = sand.u32 51, %s219
    %s221 = sshrl.u32 %s220, 2
    %s222 = sor.u32 %s220, %s221
    %s223 = sand.u32 15, %s222
    %v224 = vld [vmem:[%s214] sm:%s223]
    %v225 = vunpack.c.l.bf16 %v224
    %v226 = vunpack.c.h.bf16 %v224
    %s227 = scalar_lea.vmem [#allocation1], 24
    %228 = vst [vmem:[%s227] sm:%s3] %v225
    %s229 = scalar_lea.vmem %s0, 4
    %s230 = sshrl.u32 %s3, 1
    %s231 = sor.u32 %s3, %s230
    %s232 = sand.u32 %s231, 85
    %s233 = sshrl.u32 %s232, 1
    %s234 = sor.u32 %s232, %s233
    %s235 = sand.u32 51, %s234
    %s236 = sshrl.u32 %s235, 2
    %s237 = sor.u32 %s235, %s236
    %s238 = sand.u32 15, %s237
    %v239 = vld [vmem:[%s229] sm:%s238]
    %v240 = vunpack.c.l.bf16 %v239
    %v241 = vunpack.c.h.bf16 %v239
    %s242 = scalar_lea.vmem [#allocation1], 16
    %243 = vst [vmem:[%s242] sm:%s3] %v240
    %s244 = scalar_lea.vmem %s0, 2
    %s245 = sshrl.u32 %s3, 1
    %s246 = sor.u32 %s3, %s245
    %s247 = sand.u32 %s246, 85
    %s248 = sshrl.u32 %s247, 1
    %s249 = sor.u32 %s247, %s248
    %s250 = sand.u32 51, %s249
    %s251 = sshrl.u32 %s250, 2
    %s252 = sor.u32 %s250, %s251
    %s253 = sand.u32 15, %s252
    %v254 = vld [vmem:[%s244] sm:%s253]
    %v255 = vunpack.c.l.bf16 %v254
    %v256 = vunpack.c.h.bf16 %v254
    %s257 = scalar_lea.vmem [#allocation1], 8
    %258 = vst [vmem:[%s257] sm:%s3] %v255
    %s259 = sshrl.u32 %s3, 1
    %s260 = sor.u32 %s3, %s259
    %s261 = sand.u32 %s260, 85
    %s262 = sshrl.u32 %s261, 1
    %s263 = sor.u32 %s261, %s262
    %s264 = sand.u32 51, %s263
    %s265 = sshrl.u32 %s264, 2
    %s266 = sor.u32 %s264, %s265
    %s267 = sand.u32 15, %s266
    %v268 = vld [vmem:[%s0] sm:%s267]
    %v269 = vunpack.c.l.bf16 %v268
    %v270 = vunpack.c.h.bf16 %v268
    %271 = vst [vmem:[#allocation1] sm:%s3] %v269
    %v272 = vld [vmem:[#allocation1] sm:$0xf]
    %vm273 = vcmask 72704
    %274 = vst.msk [vmem:[#allocation0] ss:$8 sm:$0xf] %vm273, %v272
    %s275 = scalar_lea.vmem [#allocation1], 8
    %v276 = vld [vmem:[%s275] sm:$0xf]
    %vm277 = vcmask 72704
    %s278 = scalar_lea.vmem [#allocation0], 32
    %279 = vst.msk [vmem:[%s278] ss:$8 sm:$0xf] %vm277, %v276
    %s280 = scalar_lea.vmem [#allocation1], 16
    %v281 = vld [vmem:[%s280] sm:$0xf]
    %vm282 = vcmask 72704
    %s283 = scalar_lea.vmem [#allocation0], 64
    %284 = vst.msk [vmem:[%s283] ss:$8 sm:$0xf] %vm282, %v281
    %s285 = scalar_lea.vmem [#allocation1], 24
    %v286 = vld [vmem:[%s285] sm:$0xf]
    %vm287 = vcmask 72704
    %s288 = scalar_lea.vmem [#allocation0], 96
    %289 = vst.msk [vmem:[%s288] ss:$8 sm:$0xf] %vm287, %v286
    %s290 = scalar_lea.vmem [#allocation1], 32
    %v291 = vld [vmem:[%s290] sm:$0xf]
    %vm292 = vcmask 72704
    %s293 = scalar_lea.vmem [#allocation0], 128
    %294 = vst.msk [vmem:[%s293] ss:$8 sm:$0xf] %vm292, %v291
    %s295 = scalar_lea.vmem [#allocation1], 40
    %v296 = vld [vmem:[%s295] sm:$0xf]
    %vm297 = vcmask 72704
    %s298 = scalar_lea.vmem [#allocation0], 160
    %299 = vst.msk [vmem:[%s298] ss:$8 sm:$0xf] %vm297, %v296
    %s300 = scalar_lea.vmem [#allocation1], 48
    %v301 = vld [vmem:[%s300] sm:$0xf]
    %vm302 = vcmask 72704
    %s303 = scalar_lea.vmem [#allocation0], 192
    %304 = vst.msk [vmem:[%s303] ss:$8 sm:$0xf] %vm302, %v301
    %s305 = scalar_lea.vmem [#allocation1], 56
    %v306 = vld [vmem:[%s305] sm:$0xf]
    %vm307 = vcmask 72704
    %s308 = scalar_lea.vmem [#allocation0], 224
    %309 = vst.msk [vmem:[%s308] ss:$8 sm:$0xf] %vm307, %v306
    %s310 = scalar_lea.vmem [#allocation1], 64
    %v311 = vld [vmem:[%s310] sm:$0xf]
    %vm312 = vcmask 72704
    %s313 = scalar_lea.vmem [#allocation0], 256
    %314 = vst.msk [vmem:[%s313] ss:$8 sm:$0xf] %vm312, %v311
    %s315 = scalar_lea.vmem [#allocation1], 72
    %v316 = vld [vmem:[%s315] sm:$0xf]
    %vm317 = vcmask 72704
    %s318 = scalar_lea.vmem [#allocation0], 288
    %319 = vst.msk [vmem:[%s318] ss:$8 sm:$0xf] %vm317, %v316
    %s320 = scalar_lea.vmem [#allocation1], 80
    %v321 = vld [vmem:[%s320] sm:$0xf]
    %vm322 = vcmask 72704
    %s323 = scalar_lea.vmem [#allocation0], 320
    %324 = vst.msk [vmem:[%s323] ss:$8 sm:$0xf] %vm322, %v321
    %s325 = scalar_lea.vmem [#allocation1], 88
    %v326 = vld [vmem:[%s325] sm:$0xf]
    %vm327 = vcmask 72704
    %s328 = scalar_lea.vmem [#allocation0], 352
    %329 = vst.msk [vmem:[%s328] ss:$8 sm:$0xf] %vm327, %v326
    %s330 = scalar_lea.vmem [#allocation1], 96
    %v331 = vld [vmem:[%s330] sm:$0xf]
    %vm332 = vcmask 72704
    %s333 = scalar_lea.vmem [#allocation0], 384
    %334 = vst.msk [vmem:[%s333] ss:$8 sm:$0xf] %vm332, %v331
    %s335 = scalar_lea.vmem [#allocation1], 104
    %v336 = vld [vmem:[%s335] sm:$0xf]
    %vm337 = vcmask 72704
    %s338 = scalar_lea.vmem [#allocation0], 416
    %339 = vst.msk [vmem:[%s338] ss:$8 sm:$0xf] %vm337, %v336
    %s340 = scalar_lea.vmem [#allocation1], 112
    %v341 = vld [vmem:[%s340] sm:$0xf]
    %vm342 = vcmask 72704
    %s343 = scalar_lea.vmem [#allocation0], 448
    %344 = vst.msk [vmem:[%s343] ss:$8 sm:$0xf] %vm342, %v341
    %s345 = scalar_lea.vmem [#allocation1], 120
    %v346 = vld [vmem:[%s345] sm:$0xf]
    %vm347 = vcmask 72704
    %s348 = scalar_lea.vmem [#allocation0], 480
    %349 = vst.msk [vmem:[%s348] ss:$8 sm:$0xf] %vm347, %v346
    %s350 = scalar_lea.vmem [#allocation1], 128
    %v351 = vld [vmem:[%s350] sm:$0xf]
    %vm352 = vcmask 72704
    %s353 = scalar_lea.vmem [#allocation0], 512
    %354 = vst.msk [vmem:[%s353] ss:$8 sm:$0xf] %vm352, %v351
    %s355 = scalar_lea.vmem [#allocation1], 136
    %v356 = vld [vmem:[%s355] sm:$0xf]
    %vm357 = vcmask 72704
    %s358 = scalar_lea.vmem [#allocation0], 544
    %359 = vst.msk [vmem:[%s358] ss:$8 sm:$0xf] %vm357, %v356
    %v360 = vld.sshfl [vmem:[#allocation1] sm:$0xff pattern:$0xba983210]
    %361 = vrot.lane.b32.xlu0 %v360, 119
    %v362 = vpop.permute.xlu0 %361
    %vm363 = vcmask 72704
    %s364 = scalar_lea.vmem [#allocation0], 1
    %365 = vst.msk [vmem:[%s364] ss:$8 sm:$0xf] %vm363, %v362
    %s366 = scalar_lea.vmem [#allocation0], 1
    %367 = vst.msk [vmem:[%s366] ss:$8 sm:$0xf0] %vm363, %v362
    %s368 = scalar_lea.vmem [#allocation1], 16
    %v369 = vld.sshfl [vmem:[%s368] sm:$0xff pattern:$0xba983210]
    %370 = vrot.lane.b32.xlu0 %v369, 119
    %v371 = vpop.permute.xlu0 %370
    %vm372 = vcmask 72704
    %s373 = scalar_lea.vmem [#allocation0], 65
    %374 = vst.msk [vmem:[%s373] ss:$8 sm:$0xf] %vm372, %v371
    %s375 = scalar_lea.vmem [#allocation0], 65
    %376 = vst.msk [vmem:[%s375] ss:$8 sm:$0xf0] %vm372, %v371
    %s377 = scalar_lea.vmem [#allocation1], 32
    %v378 = vld.sshfl [vmem:[%s377] sm:$0xff pattern:$0xba983210]
    %379 = vrot.lane.b32.xlu0 %v378, 119
    %v380 = vpop.permute.xlu0 %379
    %vm381 = vcmask 72704
    %s382 = scalar_lea.vmem [#allocation0], 129
    %383 = vst.msk [vmem:[%s382] ss:$8 sm:$0xf] %vm381, %v380
    %s384 = scalar_lea.vmem [#allocation0], 129
    %385 = vst.msk [vmem:[%s384] ss:$8 sm:$0xf0] %vm381, %v380
    %s386 = scalar_lea.vmem [#allocation1], 48
    %v387 = vld.sshfl [vmem:[%s386] sm:$0xff pattern:$0xba983210]
    %388 = vrot.lane.b32.xlu0 %v387, 119
    %v389 = vpop.permute.xlu0 %388
    %vm390 = vcmask 72704
    %s391 = scalar_lea.vmem [#allocation0], 193
    %392 = vst.msk [vmem:[%s391] ss:$8 sm:$0xf] %vm390, %v389
    %s393 = scalar_lea.vmem [#allocation0], 193
    %394 = vst.msk [vmem:[%s393] ss:$8 sm:$0xf0] %vm390, %v389
    %s395 = scalar_lea.vmem [#allocation1], 64
    %v396 = vld.sshfl [vmem:[%s395] sm:$0xff pattern:$0xba983210]
    %397 = vrot.lane.b32.xlu0 %v396, 119
    %v398 = vpop.permute.xlu0 %397
    %vm399 = vcmask 72704
    %s400 = scalar_lea.vmem [#allocation0], 257
    %401 = vst.msk [vmem:[%s400] ss:$8 sm:$0xf] %vm399, %v398
    %s402 = scalar_lea.vmem [#allocation0], 257
    %403 = vst.msk [vmem:[%s402] ss:$8 sm:$0xf0] %vm399, %v398
    %s404 = scalar_lea.vmem [#allocation1], 80
    %v405 = vld.sshfl [vmem:[%s404] sm:$0xff pattern:$0xba983210]
    %406 = vrot.lane.b32.xlu0 %v405, 119
    %v407 = vpop.permute.xlu0 %406
    %vm408 = vcmask 72704
    %s409 = scalar_lea.vmem [#allocation0], 321
    %410 = vst.msk [vmem:[%s409] ss:$8 sm:$0xf] %vm408, %v407
    %s411 = scalar_lea.vmem [#allocation0], 321
    %412 = vst.msk [vmem:[%s411] ss:$8 sm:$0xf0] %vm408, %v407
    %s413 = scalar_lea.vmem [#allocation1], 96
    %v414 = vld.sshfl [vmem:[%s413] sm:$0xff pattern:$0xba983210]
    %415 = vrot.lane.b32.xlu0 %v414, 119
    %v416 = vpop.permute.xlu0 %415
    %vm417 = vcmask 72704
    %s418 = scalar_lea.vmem [#allocation0], 385
    %419 = vst.msk [vmem:[%s418] ss:$8 sm:$0xf] %vm417, %v416
    %s420 = scalar_lea.vmem [#allocation0], 385
    %421 = vst.msk [vmem:[%s420] ss:$8 sm:$0xf0] %vm417, %v416
    %s422 = scalar_lea.vmem [#allocation1], 112
    %v423 = vld.sshfl [vmem:[%s422] sm:$0xff pattern:$0xba983210]
    %424 = vrot.lane.b32.xlu0 %v423, 119
    %v425 = vpop.permute.xlu0 %424
    %vm426 = vcmask 72704
    %s427 = scalar_lea.vmem [#allocation0], 449
    %428 = vst.msk [vmem:[%s427] ss:$8 sm:$0xf] %vm426, %v425
    %s429 = scalar_lea.vmem [#allocation0], 449
    %430 = vst.msk [vmem:[%s429] ss:$8 sm:$0xf0] %vm426, %v425
    %s431 = scalar_lea.vmem [#allocation1], 128
    %v432 = vld.sshfl [vmem:[%s431] sm:$0xff pattern:$0xba983210]
    %433 = vrot.lane.b32.xlu0 %v432, 119
    %v434 = vpop.permute.xlu0 %433
    %vm435 = vcmask 72704
    %s436 = scalar_lea.vmem [#allocation0], 513
    %437 = vst.msk [vmem:[%s436] ss:$8 sm:$0xf] %vm435, %v434
    %s438 = scalar_lea.vmem [#allocation0], 513
    %439 = vst.msk [vmem:[%s438] ss:$8 sm:$0xf0] %vm435, %v434
    %s441 = ssub.s32 4, 1
    %v442 = vld [vmem:[#allocation0] sm:%s441]
    %v443 = vpack.c.bf16 0.0, %v442
    %s445 = ssub.s32 2, 1
    %446 = vst [vmem:[%s1] sm:%s445] %v443
    %s447 = scalar_lea.vmem [#allocation0], 8
    %v448 = vld [vmem:[%s447] sm:%s441]
    %v449 = vpack.c.bf16 0.0, %v448
    %s451 = ssub.s32 2, 1
    %s452 = scalar_lea.vmem %s1, 1
    %453 = vst [vmem:[%s452] sm:%s451] %v449
    %s454 = scalar_lea.vmem [#allocation0], 16
    %v455 = vld [vmem:[%s454] sm:%s441]
    %v456 = vpack.c.bf16 0.0, %v455
    %s458 = ssub.s32 2, 1
    %s459 = scalar_lea.vmem %s1, 2
    %460 = vst [vmem:[%s459] sm:%s458] %v456
    %s461 = scalar_lea.vmem [#allocation0], 24
    %v462 = vld [vmem:[%s461] sm:%s441]
    %v463 = vpack.c.bf16 0.0, %v462
    %s465 = ssub.s32 2, 1
    %s466 = scalar_lea.vmem %s1, 3
    %467 = vst [vmem:[%s466] sm:%s465] %v463
    %s468 = scalar_lea.vmem [#allocation0], 32
    %v469 = vld [vmem:[%s468] sm:%s441]
    %v470 = vpack.c.bf16 0.0, %v469
    %s472 = ssub.s32 2, 1
    %s473 = scalar_lea.vmem %s1, 4
    %474 = vst [vmem:[%s473] sm:%s472] %v470
    %s475 = scalar_lea.vmem [#allocation0], 40
    %v476 = vld [vmem:[%s475] sm:%s441]
    %v477 = vpack.c.bf16 0.0, %v476
    %s479 = ssub.s32 2, 1
    %s480 = scalar_lea.vmem %s1, 5
    %481 = vst [vmem:[%s480] sm:%s479] %v477
    %s482 = scalar_lea.vmem [#allocation0], 48
    %v483 = vld [vmem:[%s482] sm:%s441]
    %v484 = vpack.c.bf16 0.0, %v483
    %s486 = ssub.s32 2, 1
    %s487 = scalar_lea.vmem %s1, 6
    %488 = vst [vmem:[%s487] sm:%s486] %v484
    %s489 = scalar_lea.vmem [#allocation0], 56
    %v490 = vld [vmem:[%s489] sm:%s441]
    %v491 = vpack.c.bf16 0.0, %v490
    %s493 = ssub.s32 2, 1
    %s494 = scalar_lea.vmem %s1, 7
    %495 = vst [vmem:[%s494] sm:%s493] %v491
    %s496 = scalar_lea.vmem [#allocation0], 64
    %v497 = vld [vmem:[%s496] sm:%s441]
    %v498 = vpack.c.bf16 0.0, %v497
    %s500 = ssub.s32 2, 1
    %s501 = scalar_lea.vmem %s1, 8
    %502 = vst [vmem:[%s501] sm:%s500] %v498
    %s503 = scalar_lea.vmem [#allocation0], 72
    %v504 = vld [vmem:[%s503] sm:%s441]
    %v505 = vpack.c.bf16 0.0, %v504
    %s507 = ssub.s32 2, 1
    %s508 = scalar_lea.vmem %s1, 9
    %509 = vst [vmem:[%s508] sm:%s507] %v505
    %s510 = scalar_lea.vmem [#allocation0], 80
    %v511 = vld [vmem:[%s510] sm:%s441]
    %v512 = vpack.c.bf16 0.0, %v511
    %s514 = ssub.s32 2, 1
    %s515 = scalar_lea.vmem %s1, 10
    %516 = vst [vmem:[%s515] sm:%s514] %v512
    %s517 = scalar_lea.vmem [#allocation0], 88
    %v518 = vld [vmem:[%s517] sm:%s441]
    %v519 = vpack.c.bf16 0.0, %v518
    %s521 = ssub.s32 2, 1
    %s522 = scalar_lea.vmem %s1, 11
    %523 = vst [vmem:[%s522] sm:%s521] %v519
    %s524 = scalar_lea.vmem [#allocation0], 96
    %v525 = vld [vmem:[%s524] sm:%s441]
    %v526 = vpack.c.bf16 0.0, %v525
    %s528 = ssub.s32 2, 1
    %s529 = scalar_lea.vmem %s1, 12
    %530 = vst [vmem:[%s529] sm:%s528] %v526
    %s531 = scalar_lea.vmem [#allocation0], 104
    %v532 = vld [vmem:[%s531] sm:%s441]
    %v533 = vpack.c.bf16 0.0, %v532
    %s535 = ssub.s32 2, 1
    %s536 = scalar_lea.vmem %s1, 13
    %537 = vst [vmem:[%s536] sm:%s535] %v533
    %s538 = scalar_lea.vmem [#allocation0], 112
    %v539 = vld [vmem:[%s538] sm:%s441]
    %v540 = vpack.c.bf16 0.0, %v539
    %s542 = ssub.s32 2, 1
    %s543 = scalar_lea.vmem %s1, 14
    %544 = vst [vmem:[%s543] sm:%s542] %v540
    %s545 = scalar_lea.vmem [#allocation0], 120
    %v546 = vld [vmem:[%s545] sm:%s441]
    %v547 = vpack.c.bf16 0.0, %v546
    %s549 = ssub.s32 2, 1
    %s550 = scalar_lea.vmem %s1, 15
    %551 = vst [vmem:[%s550] sm:%s549] %v547
    %s552 = scalar_lea.vmem [#allocation0], 128
    %v553 = vld [vmem:[%s552] sm:%s441]
    %v554 = vpack.c.bf16 0.0, %v553
    %s556 = ssub.s32 2, 1
    %s557 = scalar_lea.vmem %s1, 16
    %558 = vst [vmem:[%s557] sm:%s556] %v554
    %s559 = scalar_lea.vmem [#allocation0], 136
    %v560 = vld [vmem:[%s559] sm:%s441]
    %v561 = vpack.c.bf16 0.0, %v560
    %s563 = ssub.s32 2, 1
    %s564 = scalar_lea.vmem %s1, 17
    %565 = vst [vmem:[%s564] sm:%s563] %v561
    %s566 = scalar_lea.vmem [#allocation0], 144
    %v567 = vld [vmem:[%s566] sm:%s441]
    %v568 = vpack.c.bf16 0.0, %v567
    %s570 = ssub.s32 2, 1
    %s571 = scalar_lea.vmem %s1, 18
    %572 = vst [vmem:[%s571] sm:%s570] %v568
    %s573 = scalar_lea.vmem [#allocation0], 152
    %v574 = vld [vmem:[%s573] sm:%s441]
    %v575 = vpack.c.bf16 0.0, %v574
    %s577 = ssub.s32 2, 1
    %s578 = scalar_lea.vmem %s1, 19
    %579 = vst [vmem:[%s578] sm:%s577] %v575
    %s580 = scalar_lea.vmem [#allocation0], 160
    %v581 = vld [vmem:[%s580] sm:%s441]
    %v582 = vpack.c.bf16 0.0, %v581
    %s584 = ssub.s32 2, 1
    %s585 = scalar_lea.vmem %s1, 20
    %586 = vst [vmem:[%s585] sm:%s584] %v582
    %s587 = scalar_lea.vmem [#allocation0], 168
    %v588 = vld [vmem:[%s587] sm:%s441]
    %v589 = vpack.c.bf16 0.0, %v588
    %s591 = ssub.s32 2, 1
    %s592 = scalar_lea.vmem %s1, 21
    %593 = vst [vmem:[%s592] sm:%s591] %v589
    %s594 = scalar_lea.vmem [#allocation0], 176
    %v595 = vld [vmem:[%s594] sm:%s441]
    %v596 = vpack.c.bf16 0.0, %v595
    %s598 = ssub.s32 2, 1
    %s599 = scalar_lea.vmem %s1, 22
    %600 = vst [vmem:[%s599] sm:%s598] %v596
    %s601 = scalar_lea.vmem [#allocation0], 184
    %v602 = vld [vmem:[%s601] sm:%s441]
    %v603 = vpack.c.bf16 0.0, %v602
    %s605 = ssub.s32 2, 1
    %s606 = scalar_lea.vmem %s1, 23
    %607 = vst [vmem:[%s606] sm:%s605] %v603
    %s608 = scalar_lea.vmem [#allocation0], 192
    %v609 = vld [vmem:[%s608] sm:%s441]
    %v610 = vpack.c.bf16 0.0, %v609
    %s612 = ssub.s32 2, 1
    %s613 = scalar_lea.vmem %s1, 24
    %614 = vst [vmem:[%s613] sm:%s612] %v610
    %s615 = scalar_lea.vmem [#allocation0], 200
    %v616 = vld [vmem:[%s615] sm:%s441]
    %v617 = vpack.c.bf16 0.0, %v616
    %s619 = ssub.s32 2, 1
    %s620 = scalar_lea.vmem %s1, 25
    %621 = vst [vmem:[%s620] sm:%s619] %v617
    %s622 = scalar_lea.vmem [#allocation0], 208
    %v623 = vld [vmem:[%s622] sm:%s441]
    %v624 = vpack.c.bf16 0.0, %v623
    %s626 = ssub.s32 2, 1
    %s627 = scalar_lea.vmem %s1, 26
    %628 = vst [vmem:[%s627] sm:%s626] %v624
    %s629 = scalar_lea.vmem [#allocation0], 216
    %v630 = vld [vmem:[%s629] sm:%s441]
    %v631 = vpack.c.bf16 0.0, %v630
    %s633 = ssub.s32 2, 1
    %s634 = scalar_lea.vmem %s1, 27
    %635 = vst [vmem:[%s634] sm:%s633] %v631
    %s636 = scalar_lea.vmem [#allocation0], 224
    %v637 = vld [vmem:[%s636] sm:%s441]
    %v638 = vpack.c.bf16 0.0, %v637
    %s640 = ssub.s32 2, 1
    %s641 = scalar_lea.vmem %s1, 28
    %642 = vst [vmem:[%s641] sm:%s640] %v638
    %s643 = scalar_lea.vmem [#allocation0], 232
    %v644 = vld [vmem:[%s643] sm:%s441]
    %v645 = vpack.c.bf16 0.0, %v644
    %s647 = ssub.s32 2, 1
    %s648 = scalar_lea.vmem %s1, 29
    %649 = vst [vmem:[%s648] sm:%s647] %v645
    %s650 = scalar_lea.vmem [#allocation0], 240
    %v651 = vld [vmem:[%s650] sm:%s441]
    %v652 = vpack.c.bf16 0.0, %v651
    %s654 = ssub.s32 2, 1
    %s655 = scalar_lea.vmem %s1, 30
    %656 = vst [vmem:[%s655] sm:%s654] %v652
    %s657 = scalar_lea.vmem [#allocation0], 248
    %v658 = vld [vmem:[%s657] sm:%s441]
    %v659 = vpack.c.bf16 0.0, %v658
    %s661 = ssub.s32 2, 1
    %s662 = scalar_lea.vmem %s1, 31
    %663 = vst [vmem:[%s662] sm:%s661] %v659
    %s664 = scalar_lea.vmem [#allocation0], 256
    %v665 = vld [vmem:[%s664] sm:%s441]
    %v666 = vpack.c.bf16 0.0, %v665
    %s668 = ssub.s32 2, 1
    %s669 = scalar_lea.vmem %s1, 32
    %670 = vst [vmem:[%s669] sm:%s668] %v666
    %s671 = scalar_lea.vmem [#allocation0], 264
    %v672 = vld [vmem:[%s671] sm:%s441]
    %v673 = vpack.c.bf16 0.0, %v672
    %s675 = ssub.s32 2, 1
    %s676 = scalar_lea.vmem %s1, 33
    %677 = vst [vmem:[%s676] sm:%s675] %v673
    %s678 = scalar_lea.vmem [#allocation0], 272
    %v679 = vld [vmem:[%s678] sm:%s441]
    %v680 = vpack.c.bf16 0.0, %v679
    %s682 = ssub.s32 2, 1
    %s683 = scalar_lea.vmem %s1, 34
    %684 = vst [vmem:[%s683] sm:%s682] %v680
    %s685 = scalar_lea.vmem [#allocation0], 280
    %v686 = vld [vmem:[%s685] sm:%s441]
    %v687 = vpack.c.bf16 0.0, %v686
    %s689 = ssub.s32 2, 1
    %s690 = scalar_lea.vmem %s1, 35
    %691 = vst [vmem:[%s690] sm:%s689] %v687
    %s692 = scalar_lea.vmem [#allocation0], 288
    %v693 = vld [vmem:[%s692] sm:%s441]
    %v694 = vpack.c.bf16 0.0, %v693
    %s696 = ssub.s32 2, 1
    %s697 = scalar_lea.vmem %s1, 36
    %698 = vst [vmem:[%s697] sm:%s696] %v694
    %s699 = scalar_lea.vmem [#allocation0], 296
    %v700 = vld [vmem:[%s699] sm:%s441]
    %v701 = vpack.c.bf16 0.0, %v700
    %s703 = ssub.s32 2, 1
    %s704 = scalar_lea.vmem %s1, 37
    %705 = vst [vmem:[%s704] sm:%s703] %v701
    %s706 = scalar_lea.vmem [#allocation0], 304
    %v707 = vld [vmem:[%s706] sm:%s441]
    %v708 = vpack.c.bf16 0.0, %v707
    %s710 = ssub.s32 2, 1
    %s711 = scalar_lea.vmem %s1, 38
    %712 = vst [vmem:[%s711] sm:%s710] %v708
    %s713 = scalar_lea.vmem [#allocation0], 312
    %v714 = vld [vmem:[%s713] sm:%s441]
    %v715 = vpack.c.bf16 0.0, %v714
    %s717 = ssub.s32 2, 1
    %s718 = scalar_lea.vmem %s1, 39
    %719 = vst [vmem:[%s718] sm:%s717] %v715
    %s720 = scalar_lea.vmem [#allocation0], 320
    %v721 = vld [vmem:[%s720] sm:%s441]
    %v722 = vpack.c.bf16 0.0, %v721
    %s724 = ssub.s32 2, 1
    %s725 = scalar_lea.vmem %s1, 40
    %726 = vst [vmem:[%s725] sm:%s724] %v722
    %s727 = scalar_lea.vmem [#allocation0], 328
    %v728 = vld [vmem:[%s727] sm:%s441]
    %v729 = vpack.c.bf16 0.0, %v728
    %s731 = ssub.s32 2, 1
    %s732 = scalar_lea.vmem %s1, 41
    %733 = vst [vmem:[%s732] sm:%s731] %v729
    %s734 = scalar_lea.vmem [#allocation0], 336
    %v735 = vld [vmem:[%s734] sm:%s441]
    %v736 = vpack.c.bf16 0.0, %v735
    %s738 = ssub.s32 2, 1
    %s739 = scalar_lea.vmem %s1, 42
    %740 = vst [vmem:[%s739] sm:%s738] %v736
    %s741 = scalar_lea.vmem [#allocation0], 344
    %v742 = vld [vmem:[%s741] sm:%s441]
    %v743 = vpack.c.bf16 0.0, %v742
    %s745 = ssub.s32 2, 1
    %s746 = scalar_lea.vmem %s1, 43
    %747 = vst [vmem:[%s746] sm:%s745] %v743
    %s748 = scalar_lea.vmem [#allocation0], 352
    %v749 = vld [vmem:[%s748] sm:%s441]
    %v750 = vpack.c.bf16 0.0, %v749
    %s752 = ssub.s32 2, 1
    %s753 = scalar_lea.vmem %s1, 44
    %754 = vst [vmem:[%s753] sm:%s752] %v750
    %s755 = scalar_lea.vmem [#allocation0], 360
    %v756 = vld [vmem:[%s755] sm:%s441]
    %v757 = vpack.c.bf16 0.0, %v756
    %s759 = ssub.s32 2, 1
    %s760 = scalar_lea.vmem %s1, 45
    %761 = vst [vmem:[%s760] sm:%s759] %v757
    %s762 = scalar_lea.vmem [#allocation0], 368
    %v763 = vld [vmem:[%s762] sm:%s441]
    %v764 = vpack.c.bf16 0.0, %v763
    %s766 = ssub.s32 2, 1
    %s767 = scalar_lea.vmem %s1, 46
    %768 = vst [vmem:[%s767] sm:%s766] %v764
    %s769 = scalar_lea.vmem [#allocation0], 376
    %v770 = vld [vmem:[%s769] sm:%s441]
    %v771 = vpack.c.bf16 0.0, %v770
    %s773 = ssub.s32 2, 1
    %s774 = scalar_lea.vmem %s1, 47
    %775 = vst [vmem:[%s774] sm:%s773] %v771
    %s776 = scalar_lea.vmem [#allocation0], 384
    %v777 = vld [vmem:[%s776] sm:%s441]
    %v778 = vpack.c.bf16 0.0, %v777
    %s780 = ssub.s32 2, 1
    %s781 = scalar_lea.vmem %s1, 48
    %782 = vst [vmem:[%s781] sm:%s780] %v778
    %s783 = scalar_lea.vmem [#allocation0], 392
    %v784 = vld [vmem:[%s783] sm:%s441]
    %v785 = vpack.c.bf16 0.0, %v784
    %s787 = ssub.s32 2, 1
    %s788 = scalar_lea.vmem %s1, 49
    %789 = vst [vmem:[%s788] sm:%s787] %v785
    %s790 = scalar_lea.vmem [#allocation0], 400
    %v791 = vld [vmem:[%s790] sm:%s441]
    %v792 = vpack.c.bf16 0.0, %v791
    %s794 = ssub.s32 2, 1
    %s795 = scalar_lea.vmem %s1, 50
    %796 = vst [vmem:[%s795] sm:%s794] %v792
    %s797 = scalar_lea.vmem [#allocation0], 408
    %v798 = vld [vmem:[%s797] sm:%s441]
    %v799 = vpack.c.bf16 0.0, %v798
    %s801 = ssub.s32 2, 1
    %s802 = scalar_lea.vmem %s1, 51
    %803 = vst [vmem:[%s802] sm:%s801] %v799
    %s804 = scalar_lea.vmem [#allocation0], 416
    %v805 = vld [vmem:[%s804] sm:%s441]
    %v806 = vpack.c.bf16 0.0, %v805
    %s808 = ssub.s32 2, 1
    %s809 = scalar_lea.vmem %s1, 52
    %810 = vst [vmem:[%s809] sm:%s808] %v806
    %s811 = scalar_lea.vmem [#allocation0], 424
    %v812 = vld [vmem:[%s811] sm:%s441]
    %v813 = vpack.c.bf16 0.0, %v812
    %s815 = ssub.s32 2, 1
    %s816 = scalar_lea.vmem %s1, 53
    %817 = vst [vmem:[%s816] sm:%s815] %v813
    %s818 = scalar_lea.vmem [#allocation0], 432
    %v819 = vld [vmem:[%s818] sm:%s441]
    %v820 = vpack.c.bf16 0.0, %v819
    %s822 = ssub.s32 2, 1
    %s823 = scalar_lea.vmem %s1, 54
    %824 = vst [vmem:[%s823] sm:%s822] %v820
    %s825 = scalar_lea.vmem [#allocation0], 440
    %v826 = vld [vmem:[%s825] sm:%s441]
    %v827 = vpack.c.bf16 0.0, %v826
    %s829 = ssub.s32 2, 1
    %s830 = scalar_lea.vmem %s1, 55
    %831 = vst [vmem:[%s830] sm:%s829] %v827
    %s832 = scalar_lea.vmem [#allocation0], 448
    %v833 = vld [vmem:[%s832] sm:%s441]
    %v834 = vpack.c.bf16 0.0, %v833
    %s836 = ssub.s32 2, 1
    %s837 = scalar_lea.vmem %s1, 56
    %838 = vst [vmem:[%s837] sm:%s836] %v834
    %s839 = scalar_lea.vmem [#allocation0], 456
    %v840 = vld [vmem:[%s839] sm:%s441]
    %v841 = vpack.c.bf16 0.0, %v840
    %s843 = ssub.s32 2, 1
    %s844 = scalar_lea.vmem %s1, 57
    %845 = vst [vmem:[%s844] sm:%s843] %v841
    %s846 = scalar_lea.vmem [#allocation0], 464
    %v847 = vld [vmem:[%s846] sm:%s441]
    %v848 = vpack.c.bf16 0.0, %v847
    %s850 = ssub.s32 2, 1
    %s851 = scalar_lea.vmem %s1, 58
    %852 = vst [vmem:[%s851] sm:%s850] %v848
    %s853 = scalar_lea.vmem [#allocation0], 472
    %v854 = vld [vmem:[%s853] sm:%s441]
    %v855 = vpack.c.bf16 0.0, %v854
    %s857 = ssub.s32 2, 1
    %s858 = scalar_lea.vmem %s1, 59
    %859 = vst [vmem:[%s858] sm:%s857] %v855
    %s860 = scalar_lea.vmem [#allocation0], 480
    %v861 = vld [vmem:[%s860] sm:%s441]
    %v862 = vpack.c.bf16 0.0, %v861
    %s864 = ssub.s32 2, 1
    %s865 = scalar_lea.vmem %s1, 60
    %866 = vst [vmem:[%s865] sm:%s864] %v862
    %s867 = scalar_lea.vmem [#allocation0], 488
    %v868 = vld [vmem:[%s867] sm:%s441]
    %v869 = vpack.c.bf16 0.0, %v868
    %s871 = ssub.s32 2, 1
    %s872 = scalar_lea.vmem %s1, 61
    %873 = vst [vmem:[%s872] sm:%s871] %v869
    %s874 = scalar_lea.vmem [#allocation0], 496
    %v875 = vld [vmem:[%s874] sm:%s441]
    %v876 = vpack.c.bf16 0.0, %v875
    %s878 = ssub.s32 2, 1
    %s879 = scalar_lea.vmem %s1, 62
    %880 = vst [vmem:[%s879] sm:%s878] %v876
    %s881 = scalar_lea.vmem [#allocation0], 504
    %v882 = vld [vmem:[%s881] sm:%s441]
    %v883 = vpack.c.bf16 0.0, %v882
    %s885 = ssub.s32 2, 1
    %s886 = scalar_lea.vmem %s1, 63
    %887 = vst [vmem:[%s886] sm:%s885] %v883
    %s888 = scalar_lea.vmem [#allocation0], 512
    %v889 = vld [vmem:[%s888] sm:%s441]
    %v890 = vpack.c.bf16 0.0, %v889
    %s892 = ssub.s32 2, 1
    %s893 = scalar_lea.vmem %s1, 64
    %894 = vst [vmem:[%s893] sm:%s892] %v890
    %s895 = scalar_lea.vmem [#allocation0], 520
    %v896 = vld [vmem:[%s895] sm:%s441]
    %v897 = vpack.c.bf16 0.0, %v896
    %s899 = ssub.s32 2, 1
    %s900 = scalar_lea.vmem %s1, 65
    %901 = vst [vmem:[%s900] sm:%s899] %v897
    %s902 = scalar_lea.vmem [#allocation0], 528
    %v903 = vld [vmem:[%s902] sm:%s441]
    %v904 = vpack.c.bf16 0.0, %v903
    %s906 = ssub.s32 2, 1
    %s907 = scalar_lea.vmem %s1, 66
    %908 = vst [vmem:[%s907] sm:%s906] %v904
    %s909 = scalar_lea.vmem [#allocation0], 536
    %v910 = vld [vmem:[%s909] sm:%s441]
    %v911 = vpack.c.bf16 0.0, %v910
    %s913 = ssub.s32 2, 1
    %s914 = scalar_lea.vmem %s1, 67
    %915 = vst [vmem:[%s914] sm:%s913] %v911
    %s916 = scalar_lea.vmem [#allocation0], 544
    %v917 = vld [vmem:[%s916] sm:%s441]
    %v918 = vpack.c.bf16 0.0, %v917
    %s920 = ssub.s32 2, 1
    %s921 = scalar_lea.vmem %s1, 68
    %922 = vst [vmem:[%s921] sm:%s920] %v918
    %s923 = scalar_lea.vmem [#allocation0], 552
    %v924 = vld [vmem:[%s923] sm:%s441]
    %v925 = vpack.c.bf16 0.0, %v924
    %s927 = ssub.s32 2, 1
    %s928 = scalar_lea.vmem %s1, 69
    %929 = vst [vmem:[%s928] sm:%s927] %v925
    %s930 = scalar_lea.vmem [#allocation0], 560
    %v931 = vld [vmem:[%s930] sm:%s441]
    %v932 = vpack.c.bf16 0.0, %v931
    %s934 = ssub.s32 2, 1
    %s935 = scalar_lea.vmem %s1, 70
    %936 = vst [vmem:[%s935] sm:%s934] %v932
    %s937 = scalar_lea.vmem [#allocation0], 568
    %v938 = vld [vmem:[%s937] sm:%s441]
    %v939 = vpack.c.bf16 0.0, %v938
    %s941 = ssub.s32 2, 1
    %s942 = scalar_lea.vmem %s1, 71
    %943 = vst [vmem:[%s942] sm:%s941] %v939

// kernel: bottleneck_attention.4
$region0: #{bottleneck_attention.4}
  #allocation0 [shape = 'u32[]', space=smem, size = 0x4, offset = 0x4, fixed_abs, tag = 'smem constant byte address 0x4 - core index']
  #allocation1 [shape = 'u32[72,128]{1,0:T(1,128)}', space=vmem, size = 0x9000, scoped, tag = 'internal scratch']
  %s0 = inlined_call_operand.vmem [shape: bf16[128,384], index: 0, kind: input, shape index: {}]
  %s1 = inlined_call_operand.vmem [shape: bf16[384,128], index: 1, kind: input, shape index: {}]
  %s2 = inlined_call_operand.vmem [shape: f32[1,128], index: 2, kind: input, shape index: {}]
  %s3 = inlined_call_operand.vmem [shape: bf16[128,128], index: 3, kind: output, shape index: {0}]
  %s4 = inlined_call_operand.vmem [shape: f32[128,1], index: 4, kind: output, shape index: {1}]
  %5 = xla_tuple %s3, %s4
  %s6 = sld [smem:[#allocation0]]
  $region30: #{bottleneck_attention.4} parent=0
    _
  %s8 = ssub.s32 1, %s6
  %s9 = scalar_select 0, %s8, %s6
  // Predicated region
  $region2: #{bottleneck_attention.4} parent=0 // pred_check
    _
  $region3: #{bottleneck_attention.4} parent=0 // pred_check_branch
    %11 = sbr.rel (0) target = $region5
  $region4: #{bottleneck_attention.4} parent=0 // pred_region
    _
  $region5: #{bottleneck_attention.4} parent=0 // pred_fallthru
    _
  // Predicated region
  $region6: #{bottleneck_attention.4} parent=0 // pred_check
    _
  $region7: #{bottleneck_attention.4} parent=0 // pred_check_branch
    %13 = sbr.rel (0) target = $region9
  $region8: #{bottleneck_attention.4} parent=0 // pred_region
    _
  $region9: #{bottleneck_attention.4} parent=0 // pred_fallthru
    _
  // Predicated region
  $region10: #{bottleneck_attention.4} parent=0 // pred_check
    _
  $region11: #{bottleneck_attention.4} parent=0 // pred_check_branch
    %15 = sbr.rel (0) target = $region13
  $region12: #{bottleneck_attention.4} parent=0 // pred_region
    _
  $region13: #{bottleneck_attention.4} parent=0 // pred_fallthru
    _
  %v16 = vld [vmem:[%s0] sm:$0xff]
  %v17 = vld [vmem:[%s0 + $0x8] sm:$0xf]
  %v18 = vld [vmem:[%s0 + $0xc] sm:$0xff]
  %v19 = vld [vmem:[%s0 + $0x14] sm:$0xf]
  %v20 = vld [vmem:[%s0 + $0x18] sm:$0xff]
  %v21 = vld [vmem:[%s0 + $0x20] sm:$0xf]
  %v22 = vld [vmem:[%s0 + $0x24] sm:$0xff]
  %v23 = vld [vmem:[%s0 + $0x2c] sm:$0xf]
  %v24 = vld [vmem:[%s0 + $0x30] sm:$0xff]
  %v25 = vld [vmem:[%s0 + $0x38] sm:$0xf]
  %v26 = vld [vmem:[%s0 + $0x3c] sm:$0xff]
  %v27 = vld [vmem:[%s0 + $0x44] sm:$0xf]
  %v28 = vld [vmem:[%s0 + $0x48] sm:$0xff]
  %v29 = vld [vmem:[%s0 + $0x50] sm:$0xf]
  %v30 = vld [vmem:[%s0 + $0x54] sm:$0xff]
  %v31 = vld [vmem:[%s0 + $0x5c] sm:$0xf]
  %v32 = vld [vmem:[%s0 + $0x60] sm:$0xff]
  %v33 = vld [vmem:[%s0 + $0x68] sm:$0xf]
  %v34 = vld [vmem:[%s0 + $0x6c] sm:$0xff]
  %v35 = vld [vmem:[%s0 + $0x74] sm:$0xf]
  %v36 = vld [vmem:[%s0 + $0x78] sm:$0xff]
  %v37 = vld [vmem:[%s0 + $0x80] sm:$0xf]
  %v38 = vld [vmem:[%s0 + $0x84] sm:$0xff]
  %v39 = vld [vmem:[%s0 + $0x8c] sm:$0xf]
  %v40 = vld [vmem:[%s0 + $0x90] sm:$0xff]
  %v41 = vld [vmem:[%s0 + $0x98] sm:$0xf]
  %v42 = vld [vmem:[%s0 + $0x9c] sm:$0xff]
  %v43 = vld [vmem:[%s0 + $0xa4] sm:$0xf]
  %v44 = vld [vmem:[%s0 + $0xa8] sm:$0xff]
  %v45 = vld [vmem:[%s0 + $0xb0] sm:$0xf]
  %v46 = vld [vmem:[%s0 + $0xb4] sm:$0xff]
  %v47 = vld [vmem:[%s0 + $0xbc] sm:$0xf]
  %v48 = vld [vmem:[%s1] sm:$0xf]
  %v49 = vld [vmem:[%s1 + $0x4] sm:$0xf]
  %v50 = vld [vmem:[%s1 + $0x8] sm:$0xf]
  %v51 = vld [vmem:[%s1 + $0xc] sm:$0xf]
  %v52 = vld [vmem:[%s1 + $0x10] sm:$0xf]
  %v53 = vld [vmem:[%s1 + $0x14] sm:$0xf]
  %v54 = vld [vmem:[%s1 + $0x18] sm:$0xf]
  %v55 = vld [vmem:[%s1 + $0x1c] sm:$0xf]
  %v56 = vld [vmem:[%s1 + $0x20] sm:$0xf]
  %v57 = vld [vmem:[%s1 + $0x24] sm:$0xf]
  %v58 = vld [vmem:[%s1 + $0x28] sm:$0xf]
  %v59 = vld [vmem:[%s1 + $0x2c] sm:$0xf]
  %v60 = vld [vmem:[%s1 + $0x30] sm:$0xf]
  %v61 = vld [vmem:[%s1 + $0x34] sm:$0xf]
  %v62 = vld [vmem:[%s1 + $0x38] sm:$0xf]
  %v63 = vld [vmem:[%s1 + $0x3c] sm:$0xf]
  %v64 = vld [vmem:[%s1 + $0x40] sm:$0xf]
  %v65 = vld [vmem:[%s1 + $0x44] sm:$0xf]
  %v66 = vld [vmem:[%s1 + $0x48] sm:$0xf]
  %v67 = vld [vmem:[%s1 + $0x4c] sm:$0xf]
  %v68 = vld [vmem:[%s1 + $0x50] sm:$0xf]
  %v69 = vld [vmem:[%s1 + $0x54] sm:$0xf]
  %v70 = vld [vmem:[%s1 + $0x58] sm:$0xf]
  %v71 = vld [vmem:[%s1 + $0x5c] sm:$0xf]
  %v72 = vld [vmem:[%s1 + $0x60] sm:$0xf]
  %v73 = vld [vmem:[%s1 + $0x64] sm:$0xf]
  %v74 = vld [vmem:[%s1 + $0x68] sm:$0xf]
  %v75 = vld [vmem:[%s1 + $0x6c] sm:$0xf]
  %v76 = vld [vmem:[%s1 + $0x70] sm:$0xf]
  %v77 = vld [vmem:[%s1 + $0x74] sm:$0xf]
  %v78 = vld [vmem:[%s1 + $0x78] sm:$0xf]
  %v79 = vld [vmem:[%s1 + $0x7c] sm:$0xf]
  %v80 = vld [vmem:[%s1 + $0x80] sm:$0xf]
  %v81 = vld [vmem:[%s1 + $0x84] sm:$0xf]
  %v82 = vld [vmem:[%s1 + $0x88] sm:$0xf]
  %v83 = vld [vmem:[%s1 + $0x8c] sm:$0xf]
  %v84 = vld [vmem:[%s1 + $0x90] sm:$0xf]
  %v85 = vld [vmem:[%s1 + $0x94] sm:$0xf]
  %v86 = vld [vmem:[%s1 + $0x98] sm:$0xf]
  %v87 = vld [vmem:[%s1 + $0x9c] sm:$0xf]
  %v88 = vld [vmem:[%s1 + $0xa0] sm:$0xf]
  %v89 = vld [vmem:[%s1 + $0xa4] sm:$0xf]
  %v90 = vld [vmem:[%s1 + $0xa8] sm:$0xf]
  %v91 = vld [vmem:[%s1 + $0xac] sm:$0xf]
  %v92 = vld [vmem:[%s1 + $0xb0] sm:$0xf]
  %v93 = vld [vmem:[%s1 + $0xb4] sm:$0xf]
  %v94 = vld [vmem:[%s1 + $0xb8] sm:$0xf]
  %v95 = vld [vmem:[%s1 + $0xbc] sm:$0xf]
  %v96 = vld [vmem:[%s2] sm:$0x1]
  %v98 = vperm.slane %v96, 0
  %v132 = vunpack.c.l.b16 %v16
  %v133 = vunpack.c.h.b16 %v16
  %v134 = vunpack.c.l.b16 %v17
  %v135 = vunpack.c.l.b16 %v18
  %v136 = vunpack.c.h.b16 %v18
  %v137 = vunpack.c.l.b16 %v19
  %v138 = vunpack.c.l.b16 %v20
  %v139 = vunpack.c.h.b16 %v20
  %v140 = vunpack.c.l.b16 %v21
  %v141 = vunpack.c.l.b16 %v22
  %v142 = vunpack.c.h.b16 %v22
  %v143 = vunpack.c.l.b16 %v23
  %v144 = vunpack.c.l.b16 %v24
  %v145 = vunpack.c.h.b16 %v24
  %v146 = vunpack.c.l.b16 %v25
  %v147 = vunpack.c.l.b16 %v26
  %v148 = vunpack.c.h.b16 %v26
  %v149 = vunpack.c.l.b16 %v27
  %v150 = vunpack.c.l.b16 %v28
  %v151 = vunpack.c.h.b16 %v28
  %v152 = vunpack.c.l.b16 %v29
  %v153 = vunpack.c.l.b16 %v30
  %v154 = vunpack.c.h.b16 %v30
  %v155 = vunpack.c.l.b16 %v31
  %v156 = vunpack.c.l.b16 %v32
  %v157 = vunpack.c.h.b16 %v32
  %v158 = vunpack.c.l.b16 %v33
  %v159 = vunpack.c.l.b16 %v34
  %v160 = vunpack.c.h.b16 %v34
  %v161 = vunpack.c.l.b16 %v35
  %v162 = vunpack.c.l.b16 %v36
  %v163 = vunpack.c.h.b16 %v36
  %v164 = vunpack.c.l.b16 %v37
  %v165 = vunpack.c.l.b16 %v38
  %v166 = vunpack.c.h.b16 %v38
  %v167 = vunpack.c.l.b16 %v39
  %v168 = vunpack.c.l.b16 %v40
  %v169 = vunpack.c.h.b16 %v40
  %v170 = vunpack.c.l.b16 %v41
  %v171 = vunpack.c.l.b16 %v42
  %v172 = vunpack.c.h.b16 %v42
  %v173 = vunpack.c.l.b16 %v43
  %v174 = vunpack.c.l.b16 %v44
  %v175 = vunpack.c.h.b16 %v44
  %v176 = vunpack.c.l.b16 %v45
  %v177 = vunpack.c.l.b16 %v46
  %v178 = vunpack.c.h.b16 %v46
  %v179 = vunpack.c.l.b16 %v47
  %v180 = vpack.c.b16 %v135, %v132
  %v181 = vpack.c.b16 %v136, %v133
  %v182 = vpack.c.b16 %v137, %v134
  %v183 = vpack.c.b16 %v141, %v138
  %v184 = vpack.c.b16 %v142, %v139
  %v185 = vpack.c.b16 %v143, %v140
  %v186 = vpack.c.b16 %v147, %v144
  %v187 = vpack.c.b16 %v148, %v145
  %v188 = vpack.c.b16 %v149, %v146
  %v189 = vpack.c.b16 %v153, %v150
  %v190 = vpack.c.b16 %v154, %v151
  %v191 = vpack.c.b16 %v155, %v152
  %v192 = vpack.c.b16 %v159, %v156
  %v193 = vpack.c.b16 %v160, %v157
  %v194 = vpack.c.b16 %v161, %v158
  %v195 = vpack.c.b16 %v165, %v162
  %v196 = vpack.c.b16 %v166, %v163
  %v197 = vpack.c.b16 %v167, %v164
  %v198 = vpack.c.b16 %v171, %v168
  %v199 = vpack.c.b16 %v172, %v169
  %v200 = vpack.c.b16 %v173, %v170
  %v201 = vpack.c.b16 %v177, %v174
  %v202 = vpack.c.b16 %v178, %v175
  %v203 = vpack.c.b16 %v179, %v176
  %v276 = vunpack.c.l.b16 %v48
  %v277 = vunpack.c.l.b16 %v49
  %v278 = vunpack.c.l.b16 %v50
  %v279 = vunpack.c.l.b16 %v51
  %v280 = vunpack.c.l.b16 %v52
  %v281 = vunpack.c.l.b16 %v53
  %v282 = vunpack.c.l.b16 %v54
  %v283 = vunpack.c.l.b16 %v55
  %v284 = vunpack.c.l.b16 %v56
  %v285 = vunpack.c.l.b16 %v57
  %v286 = vunpack.c.l.b16 %v58
  %v287 = vunpack.c.l.b16 %v59
  %v288 = vunpack.c.l.b16 %v60
  %v289 = vunpack.c.l.b16 %v61
  %v290 = vunpack.c.l.b16 %v62
  %v291 = vunpack.c.l.b16 %v63
  %v292 = vunpack.c.l.b16 %v64
  %v293 = vunpack.c.l.b16 %v65
  %v294 = vunpack.c.l.b16 %v66
  %v295 = vunpack.c.l.b16 %v67
  %v296 = vunpack.c.l.b16 %v68
  %v297 = vunpack.c.l.b16 %v69
  %v298 = vunpack.c.l.b16 %v70
  %v299 = vunpack.c.l.b16 %v71
  %v300 = vunpack.c.l.b16 %v72
  %v301 = vunpack.c.l.b16 %v73
  %v302 = vunpack.c.l.b16 %v74
  %v303 = vunpack.c.l.b16 %v75
  %v304 = vunpack.c.l.b16 %v76
  %v305 = vunpack.c.l.b16 %v77
  %v306 = vunpack.c.l.b16 %v78
  %v307 = vunpack.c.l.b16 %v79
  %v308 = vunpack.c.l.b16 %v80
  %v309 = vunpack.c.l.b16 %v81
  %v310 = vunpack.c.l.b16 %v82
  %v311 = vunpack.c.l.b16 %v83
  %v312 = vunpack.c.l.b16 %v84
  %v313 = vunpack.c.l.b16 %v85
  %v314 = vunpack.c.l.b16 %v86
  %v315 = vunpack.c.l.b16 %v87
  %v316 = vunpack.c.l.b16 %v88
  %v317 = vunpack.c.l.b16 %v89
  %v318 = vunpack.c.l.b16 %v90
  %v319 = vunpack.c.l.b16 %v91
  %v320 = vunpack.c.l.b16 %v92
  %v321 = vunpack.c.l.b16 %v93
  %v322 = vunpack.c.l.b16 %v94
  %v323 = vunpack.c.l.b16 %v95
  %v324 = vpack.c.b16 %v277, %v276
  %v325 = vpack.c.b16 %v279, %v278
  %v326 = vpack.c.b16 %v281, %v280
  %v327 = vpack.c.b16 %v283, %v282
  %v328 = vpack.c.b16 %v285, %v284
  %v329 = vpack.c.b16 %v287, %v286
  %v330 = vpack.c.b16 %v289, %v288
  %v331 = vpack.c.b16 %v291, %v290
  %v332 = vpack.c.b16 %v293, %v292
  %v333 = vpack.c.b16 %v295, %v294
  %v334 = vpack.c.b16 %v297, %v296
  %v335 = vpack.c.b16 %v299, %v298
  %v336 = vpack.c.b16 %v301, %v300
  %v337 = vpack.c.b16 %v303, %v302
  %v338 = vpack.c.b16 %v305, %v304
  %v339 = vpack.c.b16 %v307, %v306
  %v340 = vpack.c.b16 %v309, %v308
  %v341 = vpack.c.b16 %v311, %v310
  %v342 = vpack.c.b16 %v313, %v312
  %v343 = vpack.c.b16 %v315, %v314
  %v344 = vpack.c.b16 %v317, %v316
  %v345 = vpack.c.b16 %v319, %v318
  %v346 = vpack.c.b16 %v321, %v320
  %v347 = vpack.c.b16 %v323, %v322
  %372 = vmatpush.bf16.msra.mxu0 %v331
  %373 = vmatpush.bf16.msra.mxu0 %v330
  %374 = vmatpush.bf16.msra.mxu0 %v329
  %375 = vmatpush.bf16.msra.mxu0 %v328
  %376 = vmatpush.bf16.msra.mxu0 %v327
  %377 = vmatpush.bf16.msra.mxu0 %v326
  %378 = vmatpush.bf16.msra.mxu0 %v325
  %379 = vmatpush.bf16.msra.mxu0 %v324
  %380 = vmatmul.bf16.gmra.mxu0 %v180
  %v381 = vpop.f32.mrf.mxu0
  %v382 = vadd.f32 %v98, %v381
  %v383 = vpop.f32.mrf.mxu0
  %v384 = vadd.f32 %v98, %v383
  %385 = vmatmul.bf16.gmra.mxu0 %v183
  %v386 = vpop.f32.mrf.mxu0
  %v387 = vadd.f32 %v98, %v386
  %v388 = vpop.f32.mrf.mxu0
  %v389 = vadd.f32 %v98, %v388
  %390 = vmatmul.bf16.gmra.mxu0 %v186
  %v391 = vpop.f32.mrf.mxu0
  %v392 = vadd.f32 %v98, %v391
  %v393 = vpop.f32.mrf.mxu0
  %v394 = vadd.f32 %v98, %v393
  %395 = vmatmul.bf16.gmra.mxu0 %v189
  %v396 = vpop.f32.mrf.mxu0
  %v397 = vadd.f32 %v98, %v396
  %v398 = vpop.f32.mrf.mxu0
  %v399 = vadd.f32 %v98, %v398
  %400 = vmatmul.bf16.gmra.mxu0 %v192
  %v401 = vpop.f32.mrf.mxu0
  %v402 = vadd.f32 %v98, %v401
  %v403 = vpop.f32.mrf.mxu0
  %v404 = vadd.f32 %v98, %v403
  %405 = vmatmul.bf16.gmra.mxu0 %v195
  %v406 = vpop.f32.mrf.mxu0
  %v407 = vadd.f32 %v98, %v406
  %v408 = vpop.f32.mrf.mxu0
  %v409 = vadd.f32 %v98, %v408
  %410 = vmatmul.bf16.gmra.mxu0 %v198
  %v411 = vpop.f32.mrf.mxu0
  %v412 = vadd.f32 %v98, %v411
  %v413 = vpop.f32.mrf.mxu0
  %v414 = vadd.f32 %v98, %v413
  %415 = vmatmul.bf16.gmra.mxu0 %v201
  %v416 = vpop.f32.mrf.mxu0
  %v417 = vadd.f32 %v98, %v416
  %v418 = vpop.f32.mrf.mxu0
  %v419 = vadd.f32 %v98, %v418
  %420 = vdwg.mxu0
  %421 = vmatpush.bf16.msra.mxu0 %v339
  %422 = vmatpush.bf16.msra.mxu0 %v338
  %423 = vmatpush.bf16.msra.mxu0 %v337
  %424 = vmatpush.bf16.msra.mxu0 %v336
  %425 = vmatpush.bf16.msra.mxu0 %v335
  %426 = vmatpush.bf16.msra.mxu0 %v334
  %427 = vmatpush.bf16.msra.mxu0 %v333
  %428 = vmatpush.bf16.msra.mxu0 %v332
  %429 = vmatmul.bf16.gmra.mxu0 %v181
  %v430 = vpop.f32.mrf.mxu0
  %v431 = vadd.f32 %v382, %v430
  %v432 = vpop.f32.mrf.mxu0
  %v433 = vadd.f32 %v384, %v432
  %434 = vmatmul.bf16.gmra.mxu0 %v184
  %v435 = vpop.f32.mrf.mxu0
  %v436 = vadd.f32 %v387, %v435
  %v437 = vpop.f32.mrf.mxu0
  %v438 = vadd.f32 %v389, %v437
  %439 = vmatmul.bf16.gmra.mxu0 %v187
  %v440 = vpop.f32.mrf.mxu0
  %v441 = vadd.f32 %v392, %v440
  %v442 = vpop.f32.mrf.mxu0
  %v443 = vadd.f32 %v394, %v442
  %444 = vmatmul.bf16.gmra.mxu0 %v190
  %v445 = vpop.f32.mrf.mxu0
  %v446 = vadd.f32 %v397, %v445
  %v447 = vpop.f32.mrf.mxu0
  %v448 = vadd.f32 %v399, %v447
  %449 = vmatmul.bf16.gmra.mxu0 %v193
  %v450 = vpop.f32.mrf.mxu0
  %v451 = vadd.f32 %v402, %v450
  %v452 = vpop.f32.mrf.mxu0
  %v453 = vadd.f32 %v404, %v452
  %454 = vmatmul.bf16.gmra.mxu0 %v196
  %v455 = vpop.f32.mrf.mxu0
  %v456 = vadd.f32 %v407, %v455
  %v457 = vpop.f32.mrf.mxu0
  %v458 = vadd.f32 %v409, %v457
  %459 = vmatmul.bf16.gmra.mxu0 %v199
  %v460 = vpop.f32.mrf.mxu0
  %v461 = vadd.f32 %v412, %v460
  %v462 = vpop.f32.mrf.mxu0
  %v463 = vadd.f32 %v414, %v462
  %464 = vmatmul.bf16.gmra.mxu0 %v202
  %v465 = vpop.f32.mrf.mxu0
  %v466 = vadd.f32 %v417, %v465
  %v467 = vpop.f32.mrf.mxu0
  %v468 = vadd.f32 %v419, %v467
  %469 = vdwg.mxu0
  %470 = vmatpush.bf16.msra.mxu0 %v347
  %471 = vmatpush.bf16.msra.mxu0 %v346
  %472 = vmatpush.bf16.msra.mxu0 %v345
  %473 = vmatpush.bf16.msra.mxu0 %v344
  %474 = vmatpush.bf16.msra.mxu0 %v343
  %475 = vmatpush.bf16.msra.mxu0 %v342
  %476 = vmatpush.bf16.msra.mxu0 %v341
  %477 = vmatpush.bf16.msra.mxu0 %v340
  %478 = vmatmul.bf16.gmra.mxu0 %v182
  %v479 = vpop.f32.mrf.mxu0
  %v480 = vadd.f32 %v431, %v479
  %v481 = vpop.f32.mrf.mxu0
  %v482 = vadd.f32 %v433, %v481
  %483 = vmatmul.bf16.gmra.mxu0 %v185
  %v484 = vpop.f32.mrf.mxu0
  %v485 = vadd.f32 %v436, %v484
  %v486 = vpop.f32.mrf.mxu0
  %v487 = vadd.f32 %v438, %v486
  %488 = vmatmul.bf16.gmra.mxu0 %v188
  %v489 = vpop.f32.mrf.mxu0
  %v490 = vadd.f32 %v441, %v489
  %v491 = vpop.f32.mrf.mxu0
  %v492 = vadd.f32 %v443, %v491
  %493 = vmatmul.bf16.gmra.mxu0 %v191
  %v494 = vpop.f32.mrf.mxu0
  %v495 = vadd.f32 %v446, %v494
  %v496 = vpop.f32.mrf.mxu0
  %v497 = vadd.f32 %v448, %v496
  %498 = vmatmul.bf16.gmra.mxu0 %v194
  %v499 = vpop.f32.mrf.mxu0
  %v500 = vadd.f32 %v451, %v499
  %v501 = vpop.f32.mrf.mxu0
  %v502 = vadd.f32 %v453, %v501
  %503 = vmatmul.bf16.gmra.mxu0 %v197
  %v504 = vpop.f32.mrf.mxu0
  %v505 = vadd.f32 %v456, %v504
  %v506 = vpop.f32.mrf.mxu0
  %v507 = vadd.f32 %v458, %v506
  %508 = vmatmul.bf16.gmra.mxu0 %v200
  %v509 = vpop.f32.mrf.mxu0
  %v510 = vadd.f32 %v461, %v509
  %v511 = vpop.f32.mrf.mxu0
  %v512 = vadd.f32 %v463, %v511
  %513 = vmatmul.bf16.gmra.mxu0 %v203
  %v514 = vpop.f32.mrf.mxu0
  %v515 = vadd.f32 %v466, %v514
  %v516 = vpop.f32.mrf.mxu0
  %v517 = vadd.f32 %v468, %v516
  %518 = vdwg.mxu0
  %v519 = vmax.f32 %v480, 0.0
  %v520 = vmax.f32 %v482, 0.0
  %v521 = vmax.f32 %v485, 0.0
  %v522 = vmax.f32 %v487, 0.0
  %v523 = vmax.f32 %v490, 0.0
  %v524 = vmax.f32 %v492, 0.0
  %v525 = vmax.f32 %v495, 0.0
  %v526 = vmax.f32 %v497, 0.0
  %v527 = vmax.f32 %v500, 0.0
  %v528 = vmax.f32 %v502, 0.0
  %v529 = vmax.f32 %v505, 0.0
  %v530 = vmax.f32 %v507, 0.0
  %v531 = vmax.f32 %v510, 0.0
  %v532 = vmax.f32 %v512, 0.0
  %v533 = vmax.f32 %v515, 0.0
  %v534 = vmax.f32 %v517, 0.0
  %v535 = vmul.f32 %v519, %v519
  %v536 = vmul.f32 %v520, %v520
  %v537 = vmul.f32 %v521, %v521
  %v538 = vmul.f32 %v522, %v522
  %v539 = vmul.f32 %v523, %v523
  %v540 = vmul.f32 %v524, %v524
  %v541 = vmul.f32 %v525, %v525
  %v542 = vmul.f32 %v526, %v526
  %v543 = vmul.f32 %v527, %v527
  %v544 = vmul.f32 %v528, %v528
  %v545 = vmul.f32 %v529, %v529
  %v546 = vmul.f32 %v530, %v530
  %v547 = vmul.f32 %v531, %v531
  %v548 = vmul.f32 %v532, %v532
  %v549 = vmul.f32 %v533, %v533
  %v550 = vmul.f32 %v534, %v534
  %551 = vadd.xlane.f32.xlu0 %v535
  %v552 = vpop.xlane.xlu0 %551
  %553 = vadd.xlane.f32.xlu0 %v536
  %v554 = vpop.xlane.xlu0 %553
  %555 = vadd.xlane.f32.xlu0 %v537
  %v556 = vpop.xlane.xlu0 %555
  %557 = vadd.xlane.f32.xlu0 %v538
  %v558 = vpop.xlane.xlu0 %557
  %559 = vadd.xlane.f32.xlu0 %v539
  %v560 = vpop.xlane.xlu0 %559
  %561 = vadd.xlane.f32.xlu0 %v540
  %v562 = vpop.xlane.xlu0 %561
  %563 = vadd.xlane.f32.xlu0 %v541
  %v564 = vpop.xlane.xlu0 %563
  %565 = vadd.xlane.f32.xlu0 %v542
  %v566 = vpop.xlane.xlu0 %565
  %567 = vadd.xlane.f32.xlu0 %v543
  %v568 = vpop.xlane.xlu0 %567
  %569 = vadd.xlane.f32.xlu0 %v544
  %v570 = vpop.xlane.xlu0 %569
  %571 = vadd.xlane.f32.xlu0 %v545
  %v572 = vpop.xlane.xlu0 %571
  %573 = vadd.xlane.f32.xlu0 %v546
  %v574 = vpop.xlane.xlu0 %573
  %575 = vadd.xlane.f32.xlu0 %v547
  %v576 = vpop.xlane.xlu0 %575
  %577 = vadd.xlane.f32.xlu0 %v548
  %v578 = vpop.xlane.xlu0 %577
  %579 = vadd.xlane.f32.xlu0 %v549
  %v580 = vpop.xlane.xlu0 %579
  %581 = vadd.xlane.f32.xlu0 %v550
  %v582 = vpop.xlane.xlu0 %581
  %v583 = vmul.f32 %v552, 0.5
  %v584 = vmul.f32 %v554, 0.5
  %v585 = vmul.f32 %v556, 0.5
  %v586 = vmul.f32 %v558, 0.5
  %v587 = vmul.f32 %v560, 0.5
  %v588 = vmul.f32 %v562, 0.5
  %v589 = vmul.f32 %v564, 0.5
  %v590 = vmul.f32 %v566, 0.5
  %v591 = vmul.f32 %v568, 0.5
  %v592 = vmul.f32 %v570, 0.5
  %v593 = vmul.f32 %v572, 0.5
  %v594 = vmul.f32 %v574, 0.5
  %v595 = vmul.f32 %v576, 0.5
  %v596 = vmul.f32 %v578, 0.5
  %v597 = vmul.f32 %v580, 0.5
  %v598 = vmul.f32 %v582, 0.5
  %vm599 = vcmask 7168
  %600 = vst.msk [vmem:[%s4] sm:$0xff] %vm599, %v583
  %601 = vst.msk [vmem:[%s4 + $0x8] sm:$0xff] %vm599, %v584
  %602 = vst.msk [vmem:[%s4 + $0x10] sm:$0xff] %vm599, %v585
  %603 = vst.msk [vmem:[%s4 + $0x18] sm:$0xff] %vm599, %v586
  %604 = vst.msk [vmem:[%s4 + $0x20] sm:$0xff] %vm599, %v587
  %605 = vst.msk [vmem:[%s4 + $0x28] sm:$0xff] %vm599, %v588
  %606 = vst.msk [vmem:[%s4 + $0x30] sm:$0xff] %vm599, %v589
  %607 = vst.msk [vmem:[%s4 + $0x38] sm:$0xff] %vm599, %v590
  %608 = vst.msk [vmem:[%s4 + $0x40] sm:$0xff] %vm599, %v591
  %609 = vst.msk [vmem:[%s4 + $0x48] sm:$0xff] %vm599, %v592
  %610 = vst.msk [vmem:[%s4 + $0x50] sm:$0xff] %vm599, %v593
  %611 = vst.msk [vmem:[%s4 + $0x58] sm:$0xff] %vm599, %v594
  %612 = vst.msk [vmem:[%s4 + $0x60] sm:$0xff] %vm599, %v595
  %613 = vst.msk [vmem:[%s4 + $0x68] sm:$0xff] %vm599, %v596
  %614 = vst.msk [vmem:[%s4 + $0x70] sm:$0xff] %vm599, %v597
  %615 = vst.msk [vmem:[%s4 + $0x78] sm:$0xff] %vm599, %v598
  %v616 = vpack.c.bf16 %v519, %v519
  %v617 = vpack.c.bf16 %v520, %v520
  %v618 = vpack.c.bf16 %v521, %v521
  %v619 = vpack.c.bf16 %v522, %v522
  %v620 = vpack.c.bf16 %v523, %v523
  %v621 = vpack.c.bf16 %v524, %v524
  %v622 = vpack.c.bf16 %v525, %v525
  %v623 = vpack.c.bf16 %v526, %v526
  %v624 = vpack.c.bf16 %v527, %v527
  %v625 = vpack.c.bf16 %v528, %v528
  %v626 = vpack.c.bf16 %v529, %v529
  %v627 = vpack.c.bf16 %v530, %v530
  %v628 = vpack.c.bf16 %v531, %v531
  %v629 = vpack.c.bf16 %v532, %v532
  %v630 = vpack.c.bf16 %v533, %v533
  %v631 = vpack.c.bf16 %v534, %v534
  %632 = vst [vmem:[%s3] sm:$0xf] %v616
  %633 = vst [vmem:[%s3 + $0x4] sm:$0xf] %v617
  %634 = vst [vmem:[%s3 + $0x8] sm:$0xf] %v618
  %635 = vst [vmem:[%s3 + $0xc] sm:$0xf] %v619
  %636 = vst [vmem:[%s3 + $0x10] sm:$0xf] %v620
  %637 = vst [vmem:[%s3 + $0x14] sm:$0xf] %v621
  %638 = vst [vmem:[%s3 + $0x18] sm:$0xf] %v622
  %639 = vst [vmem:[%s3 + $0x1c] sm:$0xf] %v623
  %640 = vst [vmem:[%s3 + $0x20] sm:$0xf] %v624
  %641 = vst [vmem:[%s3 + $0x24] sm:$0xf] %v625
  %642 = vst [vmem:[%s3 + $0x28] sm:$0xf] %v626
  %643 = vst [vmem:[%s3 + $0x2c] sm:$0xf] %v627
  %644 = vst [vmem:[%s3 + $0x30] sm:$0xf] %v628
  %645 = vst [vmem:[%s3 + $0x34] sm:$0xf] %v629
  %646 = vst [vmem:[%s3 + $0x38] sm:$0xf] %v630
  %647 = vst [vmem:[%s3 + $0x3c] sm:$0xf] %v631
  // Predicated region
  $region14: #{bottleneck_attention.4} parent=0 // pred_check
    _
  $region15: #{bottleneck_attention.4} parent=0 // pred_check_branch
    %649 = sbr.rel (0) target = $region17
  $region16: #{bottleneck_attention.4} parent=0 // pred_region
    _
  $region17: #{bottleneck_attention.4} parent=0 // pred_fallthru
    _
  // Predicated region
  $region18: #{bottleneck_attention.4} parent=0 // pred_check
    _
  $region19: #{bottleneck_attention.4} parent=0 // pred_check_branch
    %651 = sbr.rel (0) target = $region21
  $region20: #{bottleneck_attention.4} parent=0 // pred_region
    _
  $region21: #{bottleneck_attention.4} parent=0 // pred_fallthru
    _
  // Predicated region
  $region22: #{bottleneck_attention.4} parent=0 // pred_check
    _
  $region23: #{bottleneck_attention.4} parent=0 // pred_check_branch
    %653 = sbr.rel (0) target = $region25
  $region24: #{bottleneck_attention.4} parent=0 // pred_region
    _
  $region25: #{bottleneck_attention.4} parent=0 // pred_fallthru
    _
  // Predicated region
  $region26: #{bottleneck_attention.4} parent=0 // pred_check
    _
  $region27: #{bottleneck_attention.4} parent=0 // pred_check_branch
    %655 = sbr.rel (0) target = $region29
  $region28: #{bottleneck_attention.4} parent=0 // pred_region
    _
  $region29: #{bottleneck_attention.4} parent=0 // pred_fallthru
    _

// kernel: bottleneck_attention.3
$region0: #{bottleneck_attention.3}
  #allocation0 [shape = 'u32[]', space=smem, size = 0x4, offset = 0x4, fixed_abs, tag = 'smem constant byte address 0x4 - core index']
  #allocation1 [shape = 'u32[72,128]{1,0:T(1,128)}', space=vmem, size = 0x9000, scoped, tag = 'internal scratch']
  %s0 = inlined_call_operand.vmem [shape: bf16[8,384], index: 0, kind: input, shape index: {}]
  %s1 = inlined_call_operand.vmem [shape: bf16[384,128], index: 1, kind: input, shape index: {}]
  %s2 = inlined_call_operand.vmem [shape: f32[1,128], index: 2, kind: input, shape index: {}]
  %s3 = inlined_call_operand.vmem [shape: bf16[8,128], index: 3, kind: output, shape index: {0}]
  %s4 = inlined_call_operand.vmem [shape: f32[8,1], index: 4, kind: output, shape index: {1}]
  %5 = xla_tuple %s3, %s4
  %s6 = sld [smem:[#allocation0]]
  $region30: #{bottleneck_attention.3} parent=0
    _
  %s8 = ssub.s32 1, %s6
  %s9 = scalar_select 0, %s8, %s6
  // Predicated region
  $region2: #{bottleneck_attention.3} parent=0 // pred_check
    _
  $region3: #{bottleneck_attention.3} parent=0 // pred_check_branch
    %11 = sbr.rel (0) target = $region5
  $region4: #{bottleneck_attention.3} parent=0 // pred_region
    _
  $region5: #{bottleneck_attention.3} parent=0 // pred_fallthru
    _
  // Predicated region
  $region6: #{bottleneck_attention.3} parent=0 // pred_check
    _
  $region7: #{bottleneck_attention.3} parent=0 // pred_check_branch
    %13 = sbr.rel (0) target = $region9
  $region8: #{bottleneck_attention.3} parent=0 // pred_region
    _
  $region9: #{bottleneck_attention.3} parent=0 // pred_fallthru
    _
  // Predicated region
  $region10: #{bottleneck_attention.3} parent=0 // pred_check
    _
  $region11: #{bottleneck_attention.3} parent=0 // pred_check_branch
    %15 = sbr.rel (0) target = $region13
  $region12: #{bottleneck_attention.3} parent=0 // pred_region
    _
  $region13: #{bottleneck_attention.3} parent=0 // pred_fallthru
    _
  %v16 = vld [vmem:[%s0] sm:$0xff]
  %v17 = vld [vmem:[%s0 + $0x8] sm:$0xf]
  %v18 = vld [vmem:[%s1] sm:$0xf]
  %v19 = vld [vmem:[%s1 + $0x4] sm:$0xf]
  %v20 = vld [vmem:[%s1 + $0x8] sm:$0xf]
  %v21 = vld [vmem:[%s1 + $0xc] sm:$0xf]
  %v22 = vld [vmem:[%s1 + $0x10] sm:$0xf]
  %v23 = vld [vmem:[%s1 + $0x14] sm:$0xf]
  %v24 = vld [vmem:[%s1 + $0x18] sm:$0xf]
  %v25 = vld [vmem:[%s1 + $0x1c] sm:$0xf]
  %v26 = vld [vmem:[%s1 + $0x20] sm:$0xf]
  %v27 = vld [vmem:[%s1 + $0x24] sm:$0xf]
  %v28 = vld [vmem:[%s1 + $0x28] sm:$0xf]
  %v29 = vld [vmem:[%s1 + $0x2c] sm:$0xf]
  %v30 = vld [vmem:[%s1 + $0x30] sm:$0xf]
  %v31 = vld [vmem:[%s1 + $0x34] sm:$0xf]
  %v32 = vld [vmem:[%s1 + $0x38] sm:$0xf]
  %v33 = vld [vmem:[%s1 + $0x3c] sm:$0xf]
  %v34 = vld [vmem:[%s1 + $0x40] sm:$0xf]
  %v35 = vld [vmem:[%s1 + $0x44] sm:$0xf]
  %v36 = vld [vmem:[%s1 + $0x48] sm:$0xf]
  %v37 = vld [vmem:[%s1 + $0x4c] sm:$0xf]
  %v38 = vld [vmem:[%s1 + $0x50] sm:$0xf]
  %v39 = vld [vmem:[%s1 + $0x54] sm:$0xf]
  %v40 = vld [vmem:[%s1 + $0x58] sm:$0xf]
  %v41 = vld [vmem:[%s1 + $0x5c] sm:$0xf]
  %v42 = vld [vmem:[%s1 + $0x60] sm:$0xf]
  %v43 = vld [vmem:[%s1 + $0x64] sm:$0xf]
  %v44 = vld [vmem:[%s1 + $0x68] sm:$0xf]
  %v45 = vld [vmem:[%s1 + $0x6c] sm:$0xf]
  %v46 = vld [vmem:[%s1 + $0x70] sm:$0xf]
  %v47 = vld [vmem:[%s1 + $0x74] sm:$0xf]
  %v48 = vld [vmem:[%s1 + $0x78] sm:$0xf]
  %v49 = vld [vmem:[%s1 + $0x7c] sm:$0xf]
  %v50 = vld [vmem:[%s1 + $0x80] sm:$0xf]
  %v51 = vld [vmem:[%s1 + $0x84] sm:$0xf]
  %v52 = vld [vmem:[%s1 + $0x88] sm:$0xf]
  %v53 = vld [vmem:[%s1 + $0x8c] sm:$0xf]
  %v54 = vld [vmem:[%s1 + $0x90] sm:$0xf]
  %v55 = vld [vmem:[%s1 + $0x94] sm:$0xf]
  %v56 = vld [vmem:[%s1 + $0x98] sm:$0xf]
  %v57 = vld [vmem:[%s1 + $0x9c] sm:$0xf]
  %v58 = vld [vmem:[%s1 + $0xa0] sm:$0xf]
  %v59 = vld [vmem:[%s1 + $0xa4] sm:$0xf]
  %v60 = vld [vmem:[%s1 + $0xa8] sm:$0xf]
  %v61 = vld [vmem:[%s1 + $0xac] sm:$0xf]
  %v62 = vld [vmem:[%s1 + $0xb0] sm:$0xf]
  %v63 = vld [vmem:[%s1 + $0xb4] sm:$0xf]
  %v64 = vld [vmem:[%s1 + $0xb8] sm:$0xf]
  %v65 = vld [vmem:[%s1 + $0xbc] sm:$0xf]
  %v66 = vld [vmem:[%s2] sm:$0x1]
  %v68 = vperm.slane %v66, 0
  %v72 = vunpack.c.l.b16 %v16
  %v73 = vunpack.c.h.b16 %v16
  %v74 = vunpack.c.l.b16 %v17
  %v75 = vpack.c.b16 %v72, %v72
  %v76 = vpack.c.b16 %v73, %v73
  %v77 = vpack.c.b16 %v74, %v74
  %v129 = vunpack.c.l.b16 %v18
  %v130 = vunpack.c.l.b16 %v19
  %v131 = vunpack.c.l.b16 %v20
  %v132 = vunpack.c.l.b16 %v21
  %v133 = vunpack.c.l.b16 %v22
  %v134 = vunpack.c.l.b16 %v23
  %v135 = vunpack.c.l.b16 %v24
  %v136 = vunpack.c.l.b16 %v25
  %v137 = vunpack.c.l.b16 %v26
  %v138 = vunpack.c.l.b16 %v27
  %v139 = vunpack.c.l.b16 %v28
  %v140 = vunpack.c.l.b16 %v29
  %v141 = vunpack.c.l.b16 %v30
  %v142 = vunpack.c.l.b16 %v31
  %v143 = vunpack.c.l.b16 %v32
  %v144 = vunpack.c.l.b16 %v33
  %v145 = vunpack.c.l.b16 %v34
  %v146 = vunpack.c.l.b16 %v35
  %v147 = vunpack.c.l.b16 %v36
  %v148 = vunpack.c.l.b16 %v37
  %v149 = vunpack.c.l.b16 %v38
  %v150 = vunpack.c.l.b16 %v39
  %v151 = vunpack.c.l.b16 %v40
  %v152 = vunpack.c.l.b16 %v41
  %v153 = vunpack.c.l.b16 %v42
  %v154 = vunpack.c.l.b16 %v43
  %v155 = vunpack.c.l.b16 %v44
  %v156 = vunpack.c.l.b16 %v45
  %v157 = vunpack.c.l.b16 %v46
  %v158 = vunpack.c.l.b16 %v47
  %v159 = vunpack.c.l.b16 %v48
  %v160 = vunpack.c.l.b16 %v49
  %v161 = vunpack.c.l.b16 %v50
  %v162 = vunpack.c.l.b16 %v51
  %v163 = vunpack.c.l.b16 %v52
  %v164 = vunpack.c.l.b16 %v53
  %v165 = vunpack.c.l.b16 %v54
  %v166 = vunpack.c.l.b16 %v55
  %v167 = vunpack.c.l.b16 %v56
  %v168 = vunpack.c.l.b16 %v57
  %v169 = vunpack.c.l.b16 %v58
  %v170 = vunpack.c.l.b16 %v59
  %v171 = vunpack.c.l.b16 %v60
  %v172 = vunpack.c.l.b16 %v61
  %v173 = vunpack.c.l.b16 %v62
  %v174 = vunpack.c.l.b16 %v63
  %v175 = vunpack.c.l.b16 %v64
  %v176 = vunpack.c.l.b16 %v65
  %v177 = vpack.c.b16 %v130, %v129
  %v178 = vpack.c.b16 %v132, %v131
  %v179 = vpack.c.b16 %v134, %v133
  %v180 = vpack.c.b16 %v136, %v135
  %v181 = vpack.c.b16 %v138, %v137
  %v182 = vpack.c.b16 %v140, %v139
  %v183 = vpack.c.b16 %v142, %v141
  %v184 = vpack.c.b16 %v144, %v143
  %v185 = vpack.c.b16 %v146, %v145
  %v186 = vpack.c.b16 %v148, %v147
  %v187 = vpack.c.b16 %v150, %v149
  %v188 = vpack.c.b16 %v152, %v151
  %v189 = vpack.c.b16 %v154, %v153
  %v190 = vpack.c.b16 %v156, %v155
  %v191 = vpack.c.b16 %v158, %v157
  %v192 = vpack.c.b16 %v160, %v159
  %v193 = vpack.c.b16 %v162, %v161
  %v194 = vpack.c.b16 %v164, %v163
  %v195 = vpack.c.b16 %v166, %v165
  %v196 = vpack.c.b16 %v168, %v167
  %v197 = vpack.c.b16 %v170, %v169
  %v198 = vpack.c.b16 %v172, %v171
  %v199 = vpack.c.b16 %v174, %v173
  %v200 = vpack.c.b16 %v176, %v175
  %225 = vmatpush.bf16.msra.mxu0 %v184
  %226 = vmatpush.bf16.msra.mxu0 %v183
  %227 = vmatpush.bf16.msra.mxu0 %v182
  %228 = vmatpush.bf16.msra.mxu0 %v181
  %229 = vmatpush.bf16.msra.mxu0 %v180
  %230 = vmatpush.bf16.msra.mxu0 %v179
  %231 = vmatpush.bf16.msra.mxu0 %v178
  %232 = vmatpush.bf16.msra.mxu0 %v177
  %233 = vmatmul.bf16.gmra.mxu0 %v75
  %v234 = vpop.f32.mrf.mxu0
  %v235 = vadd.f32 %v68, %v234
  %v236 = vpop.f32.mrf.mxu0
  %237 = vdwg.mxu0
  %238 = vmatpush.bf16.msra.mxu0 %v192
  %239 = vmatpush.bf16.msra.mxu0 %v191
  %240 = vmatpush.bf16.msra.mxu0 %v190
  %241 = vmatpush.bf16.msra.mxu0 %v189
  %242 = vmatpush.bf16.msra.mxu0 %v188
  %243 = vmatpush.bf16.msra.mxu0 %v187
  %244 = vmatpush.bf16.msra.mxu0 %v186
  %245 = vmatpush.bf16.msra.mxu0 %v185
  %246 = vmatmul.bf16.gmra.mxu0 %v76
  %v247 = vpop.f32.mrf.mxu0
  %v248 = vadd.f32 %v235, %v247
  %v249 = vpop.f32.mrf.mxu0
  %250 = vdwg.mxu0
  %251 = vmatpush.bf16.msra.mxu0 %v200
  %252 = vmatpush.bf16.msra.mxu0 %v199
  %253 = vmatpush.bf16.msra.mxu0 %v198
  %254 = vmatpush.bf16.msra.mxu0 %v197
  %255 = vmatpush.bf16.msra.mxu0 %v196
  %256 = vmatpush.bf16.msra.mxu0 %v195
  %257 = vmatpush.bf16.msra.mxu0 %v194
  %258 = vmatpush.bf16.msra.mxu0 %v193
  %259 = vmatmul.bf16.gmra.mxu0 %v77
  %v260 = vpop.f32.mrf.mxu0
  %v261 = vadd.f32 %v248, %v260
  %v262 = vpop.f32.mrf.mxu0
  %263 = vdwg.mxu0
  %v264 = vmax.f32 %v261, 0.0
  %v265 = vmul.f32 %v264, %v264
  %266 = vadd.xlane.f32.xlu0 %v265
  %v267 = vpop.xlane.xlu0 %266
  %v268 = vmul.f32 %v267, 0.5
  %vm269 = vcmask 7168
  %270 = vst.msk [vmem:[%s4] sm:$0xff] %vm269, %v268
  %v271 = vpack.c.bf16 %v264, %v264
  %272 = vst [vmem:[%s3] sm:$0xf] %v271
  // Predicated region
  $region14: #{bottleneck_attention.3} parent=0 // pred_check
    _
  $region15: #{bottleneck_attention.3} parent=0 // pred_check_branch
    %274 = sbr.rel (0) target = $region17
  $region16: #{bottleneck_attention.3} parent=0 // pred_region
    _
  $region17: #{bottleneck_attention.3} parent=0 // pred_fallthru
    _
  // Predicated region
  $region18: #{bottleneck_attention.3} parent=0 // pred_check
    _
  $region19: #{bottleneck_attention.3} parent=0 // pred_check_branch
    %276 = sbr.rel (0) target = $region21
  $region20: #{bottleneck_attention.3} parent=0 // pred_region
    _
  $region21: #{bottleneck_attention.3} parent=0 // pred_fallthru
    _
  // Predicated region
  $region22: #{bottleneck_attention.3} parent=0 // pred_check
    _
  $region23: #{bottleneck_attention.3} parent=0 // pred_check_branch
    %278 = sbr.rel (0) target = $region25
  $region24: #{bottleneck_attention.3} parent=0 // pred_region
    _
  $region25: #{bottleneck_attention.3} parent=0 // pred_fallthru
    _
  // Predicated region
  $region26: #{bottleneck_attention.3} parent=0 // pred_check
    _
  $region27: #{bottleneck_attention.3} parent=0 // pred_check_branch
    %280 = sbr.rel (0) target = $region29
  $region28: #{bottleneck_attention.3} parent=0 // pred_region
    _
  $region29: #{bottleneck_attention.3} parent=0 // pred_fallthru
    _

// kernel: bottleneck_attention.5
$region0: #{bottleneck_attention.5}
  #allocation0 [shape = 'u32[]', space=smem, size = 0x4, offset = 0x4, fixed_abs, tag = 'smem constant byte address 0x4 - core index']
  #allocation1 [shape = 'u32[72,128]{1,0:T(1,128)}', space=vmem, size = 0x9000, scoped, tag = 'internal scratch']
  #allocation2 [shape = 'f32[8,1]{1,0:T(8,128)}', space=vmem, size = 0x1000, scoped, tag = 'scratch operand']
  #allocation3 [shape = 'f32[8,256]{1,0:T(8,128)}', space=vmem, size = 0x2000, scoped, tag = 'scratch operand']
  #allocation4 [shape = 'f32[1]{0:T(128)S(6)}', space=smem, size = 0x200, scoped, tag = 'scoped memory for bottleneck_attention.5']
  %s0 = inlined_call_operand.vmem [shape: bf16[8,128], index: 0, kind: input, shape index: {}]
  %s1 = inlined_call_operand.vmem [shape: f32[8,1], index: 1, kind: input, shape index: {}]
  %s2 = inlined_call_operand.vmem [shape: bf16[128,128], index: 2, kind: input, shape index: {}]
  %s3 = inlined_call_operand.vmem [shape: f32[1,128], index: 3, kind: input, shape index: {}]
  %s4 = inlined_call_operand.vmem [shape: bf16[128,256], index: 4, kind: input, shape index: {}]
  %s5 = inlined_call_operand.<no memory space> [shape: f32[1], index: 5, kind: input, shape index: {}]
  %s6 = inlined_call_operand.vmem [shape: f32[8,256], index: 6, kind: output, shape index: {}]
  %s7 = sld [smem:[#allocation0]]
  $region42: #{bottleneck_attention.5} parent=0
    _
  %s9 = ssub.s32 1, %s7
  %s10 = scalar_select 0, %s9, %s7
  %11 = sst [smem:[#allocation4]] %s5
  // Predicated region
  $region2: #{bottleneck_attention.5} parent=0 // pred_check
    _
  $region3: #{bottleneck_attention.5} parent=0 // pred_check_branch
    %13 = sbr.rel (0) target = $region5
  $region4: #{bottleneck_attention.5} parent=0 // pred_region
    _
  $region5: #{bottleneck_attention.5} parent=0 // pred_fallthru
    _
  // Predicated region
  $region6: #{bottleneck_attention.5} parent=0 // pred_check
    _
  $region7: #{bottleneck_attention.5} parent=0 // pred_check_branch
    %15 = sbr.rel (0) target = $region9
  $region8: #{bottleneck_attention.5} parent=0 // pred_region
    _
  $region9: #{bottleneck_attention.5} parent=0 // pred_fallthru
    _
  // Predicated region
  $region10: #{bottleneck_attention.5} parent=0 // pred_check
    _
  $region11: #{bottleneck_attention.5} parent=0 // pred_check_branch
    %17 = sbr.rel (0) target = $region13
  $region12: #{bottleneck_attention.5} parent=0 // pred_region
    _
  $region13: #{bottleneck_attention.5} parent=0 // pred_fallthru
    _
  // Predicated region
  $region14: #{bottleneck_attention.5} parent=0 // pred_check
    _
  $region15: #{bottleneck_attention.5} parent=0 // pred_check_branch
    %19 = sbr.rel (0) target = $region17
  $region16: #{bottleneck_attention.5} parent=0 // pred_region
    _
  $region17: #{bottleneck_attention.5} parent=0 // pred_fallthru
    _
  // Predicated region
  $region18: #{bottleneck_attention.5} parent=0 // pred_check
    _
  $region19: #{bottleneck_attention.5} parent=0 // pred_check_branch
    %21 = sbr.rel (0) target = $region21
  $region20: #{bottleneck_attention.5} parent=0 // pred_region
    _
  $region21: #{bottleneck_attention.5} parent=0 // pred_fallthru
    _
  // Predicated region
  $region22: #{bottleneck_attention.5} parent=0 // pred_check
    _
  $region23: #{bottleneck_attention.5} parent=0 // pred_check_branch
    %23 = sbr.rel (0) target = $region25
  $region24: #{bottleneck_attention.5} parent=0 // pred_region
    _
  $region25: #{bottleneck_attention.5} parent=0 // pred_fallthru
    _
  %p24 = scmp.eq.s32.totalorder 0, 0
  // Predicated region
  $region26: #{bottleneck_attention.5} parent=0 // pred_check
    %p25 = pneg %p24
  $region27: #{bottleneck_attention.5} parent=0 // pred_check_branch
    %27 = sbr.rel (%p25) target = $region29
  $region28: #{bottleneck_attention.5} parent=0 // pred_region
    %vm28 = vcmask 7168
    %29 = vst.msk [vmem:[#allocation2] sm:$0xff] %vm28, -inf
    %30 = vst [vmem:[#allocation3] sm:$0xff] 0.0
    %31 = vst [vmem:[#allocation3 + $0x8] sm:$0xff] 0.0
  $region29: #{bottleneck_attention.5} parent=0 // pred_fallthru
    _
  %v32 = vld [vmem:[%s0] sm:$0xf]
  %v33 = vld [vmem:[%s2] sm:$0xf]
  %v34 = vld [vmem:[%s2 + $0x4] sm:$0xf]
  %v35 = vld [vmem:[%s2 + $0x8] sm:$0xf]
  %v36 = vld [vmem:[%s2 + $0xc] sm:$0xf]
  %v37 = vld [vmem:[%s2 + $0x10] sm:$0xf]
  %v38 = vld [vmem:[%s2 + $0x14] sm:$0xf]
  %v39 = vld [vmem:[%s2 + $0x18] sm:$0xf]
  %v40 = vld [vmem:[%s2 + $0x1c] sm:$0xf]
  %v41 = vld [vmem:[%s2 + $0x20] sm:$0xf]
  %v42 = vld [vmem:[%s2 + $0x24] sm:$0xf]
  %v43 = vld [vmem:[%s2 + $0x28] sm:$0xf]
  %v44 = vld [vmem:[%s2 + $0x2c] sm:$0xf]
  %v45 = vld [vmem:[%s2 + $0x30] sm:$0xf]
  %v46 = vld [vmem:[%s2 + $0x34] sm:$0xf]
  %v47 = vld [vmem:[%s2 + $0x38] sm:$0xf]
  %v48 = vld [vmem:[%s2 + $0x3c] sm:$0xf]
  %v65 = vunpack.c.l.b16 %v33
  %v66 = vunpack.c.l.b16 %v34
  %v67 = vunpack.c.l.b16 %v35
  %v68 = vunpack.c.l.b16 %v36
  %v69 = vunpack.c.l.b16 %v37
  %v70 = vunpack.c.l.b16 %v38
  %v71 = vunpack.c.l.b16 %v39
  %v72 = vunpack.c.l.b16 %v40
  %v73 = vunpack.c.l.b16 %v41
  %v74 = vunpack.c.l.b16 %v42
  %v75 = vunpack.c.l.b16 %v43
  %v76 = vunpack.c.l.b16 %v44
  %v77 = vunpack.c.l.b16 %v45
  %v78 = vunpack.c.l.b16 %v46
  %v79 = vunpack.c.l.b16 %v47
  %v80 = vunpack.c.l.b16 %v48
  %v81 = vpack.c.b16 %v66, %v65
  %v82 = vpack.c.b16 %v68, %v67
  %v83 = vpack.c.b16 %v70, %v69
  %v84 = vpack.c.b16 %v72, %v71
  %v85 = vpack.c.b16 %v74, %v73
  %v86 = vpack.c.b16 %v76, %v75
  %v87 = vpack.c.b16 %v78, %v77
  %v88 = vpack.c.b16 %v80, %v79
  %97 = vmatpush.bf16.xpose.msra.mxu0 %v88
  %98 = vmatpush.bf16.xpose.msra.mxu0 %v87
  %99 = vmatpush.bf16.xpose.msra.mxu0 %v86
  %100 = vmatpush.bf16.xpose.msra.mxu0 %v85
  %101 = vmatpush.bf16.xpose.msra.mxu0 %v84
  %102 = vmatpush.bf16.xpose.msra.mxu0 %v83
  %103 = vmatpush.bf16.xpose.msra.mxu0 %v82
  %104 = vmatpush.bf16.xpose.msra.mxu0 %v81
  %105 = vmatmul.bf16.gmra.mxu0 %v32
  %v106 = vpop.f32.mrf.mxu0
  %v107 = vadd.f32 0.0, %v106
  %v108 = vpop.f32.mrf.mxu0
  %109 = vdwg.mxu0
  %v110 = vld [vmem:[%s1] sm:$0xff]
  %v111 = vld [vmem:[%s3] sm:$0x1]
  %113 = vset.pattern.permute.xlu0 0
  %114 = vperm.xlu0 %113, %v110
  %v115 = vpop.permute.xlu0 %114
  %v118 = vperm.slane %v111, 0
  %v120 = vadd.f32 %v115, %v118
  %v121 = vsub.f32 %v120, %v107
  %v122 = vmax.f32 %v121, 0.0
  %v123 = vrsqrt.pop %v122
  %v124 = vmul.f32 %v123, %v122
  %v125 = vmul.f32 %v124, %v123
  %v126 = vmul.f32 0.5, %v125
  %v127 = vsub.f32 1.5, %v126
  %v128 = vmul.f32 %v123, %v127
  %v129 = vmul.f32 %v122, %v128
  %vm130 = vcmp.eq.f32.partialorder %v122, inf
  %v131 = vsel %vm130, %v122, %v129
  %vm132 = vcmp.eq.f32.partialorder %v122, 0.0
  %v133 = vand.u32 %v122, 2147483648
  %v134 = vsel %vm132, %v133, %v131
  %s135 = sld [smem:[#allocation4]]
  %v136 = vstv %s135
  %v137 = vmul.f32 %v134, %v136
  %v138 = vld [vmem:[#allocation2] sm:$0xff]
  %139 = vmax.xlane.f32.xlu0 %v137
  %v140 = vpop.xlane.xlu0 %139
  %v141 = vmax.f32 %v138, %v140
  %v142 = vsub.f32 %v138, %v141
  %v143 = vmul.f32 %v142, 1.442695
  %v144 = vpow.pop %v143
  %146 = vset.pattern.permute.xlu0 0
  %147 = vperm.xlu0 %146, %v141
  %v148 = vpop.permute.xlu0 %147
  %v150 = vsub.f32 %v137, %v148
  %v151 = vmul.f32 %v150, 1.442695
  %v152 = vpow.pop %v151
  %v153 = vpack.c.bf16 %v152, %v152
  %v154 = vld [vmem:[#allocation3] sm:$0xff]
  %v155 = vld [vmem:[#allocation3 + $0x8] sm:$0xff]
  %157 = vset.pattern.permute.xlu0 0
  %158 = vperm.xlu0 %157, %v144
  %v159 = vpop.permute.xlu0 %158
  %v161 = vmul.f32 %v159, %v154
  %v162 = vmul.f32 %v159, %v155
  %v163 = vld [vmem:[%s4] sm:$0xff]
  %v164 = vld [vmem:[%s4 + $0x8] sm:$0xff]
  %v165 = vld [vmem:[%s4 + $0x10] sm:$0xff]
  %v166 = vld [vmem:[%s4 + $0x18] sm:$0xff]
  %v167 = vld [vmem:[%s4 + $0x20] sm:$0xff]
  %v168 = vld [vmem:[%s4 + $0x28] sm:$0xff]
  %v169 = vld [vmem:[%s4 + $0x30] sm:$0xff]
  %v170 = vld [vmem:[%s4 + $0x38] sm:$0xff]
  %v171 = vld [vmem:[%s4 + $0x40] sm:$0xff]
  %v172 = vld [vmem:[%s4 + $0x48] sm:$0xff]
  %v173 = vld [vmem:[%s4 + $0x50] sm:$0xff]
  %v174 = vld [vmem:[%s4 + $0x58] sm:$0xff]
  %v175 = vld [vmem:[%s4 + $0x60] sm:$0xff]
  %v176 = vld [vmem:[%s4 + $0x68] sm:$0xff]
  %v177 = vld [vmem:[%s4 + $0x70] sm:$0xff]
  %v178 = vld [vmem:[%s4 + $0x78] sm:$0xff]
  %v195 = vunpack.c.l.b16 %v163
  %v196 = vunpack.c.h.b16 %v163
  %v197 = vunpack.c.l.b16 %v164
  %v198 = vunpack.c.h.b16 %v164
  %v199 = vunpack.c.l.b16 %v165
  %v200 = vunpack.c.h.b16 %v165
  %v201 = vunpack.c.l.b16 %v166
  %v202 = vunpack.c.h.b16 %v166
  %v203 = vunpack.c.l.b16 %v167
  %v204 = vunpack.c.h.b16 %v167
  %v205 = vunpack.c.l.b16 %v168
  %v206 = vunpack.c.h.b16 %v168
  %v207 = vunpack.c.l.b16 %v169
  %v208 = vunpack.c.h.b16 %v169
  %v209 = vunpack.c.l.b16 %v170
  %v210 = vunpack.c.h.b16 %v170
  %v211 = vunpack.c.l.b16 %v171
  %v212 = vunpack.c.h.b16 %v171
  %v213 = vunpack.c.l.b16 %v172
  %v214 = vunpack.c.h.b16 %v172
  %v215 = vunpack.c.l.b16 %v173
  %v216 = vunpack.c.h.b16 %v173
  %v217 = vunpack.c.l.b16 %v174
  %v218 = vunpack.c.h.b16 %v174
  %v219 = vunpack.c.l.b16 %v175
  %v220 = vunpack.c.h.b16 %v175
  %v221 = vunpack.c.l.b16 %v176
  %v222 = vunpack.c.h.b16 %v176
  %v223 = vunpack.c.l.b16 %v177
  %v224 = vunpack.c.h.b16 %v177
  %v225 = vunpack.c.l.b16 %v178
  %v226 = vunpack.c.h.b16 %v178
  %v227 = vpack.c.b16 %v197, %v195
  %v228 = vpack.c.b16 %v198, %v196
  %v229 = vpack.c.b16 %v201, %v199
  %v230 = vpack.c.b16 %v202, %v200
  %v231 = vpack.c.b16 %v205, %v203
  %v232 = vpack.c.b16 %v206, %v204
  %v233 = vpack.c.b16 %v209, %v207
  %v234 = vpack.c.b16 %v210, %v208
  %v235 = vpack.c.b16 %v213, %v211
  %v236 = vpack.c.b16 %v214, %v212
  %v237 = vpack.c.b16 %v217, %v215
  %v238 = vpack.c.b16 %v218, %v216
  %v239 = vpack.c.b16 %v221, %v219
  %v240 = vpack.c.b16 %v222, %v220
  %v241 = vpack.c.b16 %v225, %v223
  %v242 = vpack.c.b16 %v226, %v224
  %259 = vmatpush.bf16.msra.mxu0 %v241
  %260 = vmatpush.bf16.msra.mxu0 %v239
  %261 = vmatpush.bf16.msra.mxu0 %v237
  %262 = vmatpush.bf16.msra.mxu0 %v235
  %263 = vmatpush.bf16.msra.mxu0 %v233
  %264 = vmatpush.bf16.msra.mxu0 %v231
  %265 = vmatpush.bf16.msra.mxu0 %v229
  %266 = vmatpush.bf16.msra.mxu0 %v227
  %267 = vmatmul.bf16.gmra.mxu0 %v153
  %v268 = vpop.f32.mrf.mxu0
  %v269 = vadd.f32 0.0, %v268
  %v270 = vpop.f32.mrf.mxu0
  %271 = vdwg.mxu0
  %272 = vmatpush.bf16.msra.mxu0 %v242
  %273 = vmatpush.bf16.msra.mxu0 %v240
  %274 = vmatpush.bf16.msra.mxu0 %v238
  %275 = vmatpush.bf16.msra.mxu0 %v236
  %276 = vmatpush.bf16.msra.mxu0 %v234
  %277 = vmatpush.bf16.msra.mxu0 %v232
  %278 = vmatpush.bf16.msra.mxu0 %v230
  %279 = vmatpush.bf16.msra.mxu0 %v228
  %280 = vmatmul.bf16.gmra.mxu0 %v153
  %v281 = vpop.f32.mrf.mxu0
  %v282 = vadd.f32 0.0, %v281
  %v283 = vpop.f32.mrf.mxu0
  %284 = vdwg.mxu0
  %v285 = vadd.f32 %v161, %v269
  %v286 = vadd.f32 %v162, %v282
  %287 = vst [vmem:[#allocation3] sm:$0xff] %v285
  %288 = vst [vmem:[#allocation3 + $0x8] sm:$0xff] %v286
  %vm289 = vcmask 7168
  %290 = vst.msk [vmem:[#allocation2] sm:$0xff] %vm289, %v141
  // Predicated region
  $region30: #{bottleneck_attention.5} parent=0 // pred_check
    %p291 = pneg %p24
  $region31: #{bottleneck_attention.5} parent=0 // pred_check_branch
    %293 = sbr.rel (%p291) target = $region33
  $region32: #{bottleneck_attention.5} parent=0 // pred_region
    %v294 = vld [vmem:[#allocation3 + $0x8] sm:$0xff]
    %v295 = vrcp.pop %v294
    %v296 = vld [vmem:[#allocation3] sm:$0xff]
    %298 = vset.pattern.permute.xlu0 115
    %299 = vperm.xlu0 %298, %v295
    %v300 = vpop.permute.xlu0 %299
    %v302 = vmul.f32 %v296, %v300
    %v303 = vmul.f32 %v294, %v300
    %304 = vst [vmem:[%s6] sm:$0xff] %v302
    %305 = vst [vmem:[%s6 + $0x8] sm:$0xff] %v303
  $region33: #{bottleneck_attention.5} parent=0 // pred_fallthru
    _
  // Predicated region
  $region34: #{bottleneck_attention.5} parent=0 // pred_check
    _
  $region35: #{bottleneck_attention.5} parent=0 // pred_check_branch
    %307 = sbr.rel (0) target = $region37
  $region36: #{bottleneck_attention.5} parent=0 // pred_region
    _
  $region37: #{bottleneck_attention.5} parent=0 // pred_fallthru
    _
  // Predicated region
  $region38: #{bottleneck_attention.5} parent=0 // pred_check
    _
  $region39: #{bottleneck_attention.5} parent=0 // pred_check_branch
    %309 = sbr.rel (0) target = $region41
  $region40: #{bottleneck_attention.5} parent=0 // pred_region
    _
  $region41: #{bottleneck_attention.5} parent=0 // pred_fallthru
    _

</llo_original>
